<compile_context>
chip_gen: v6e
topology: v6e:2x2x1
jax: 0.10.0
libtpu: 0.0.40
codegen_flags: <defaults>
</compile_context>

<pallas_src>
import functools

import jax
import jax.numpy as jnp
from jax import lax
from jax.experimental import pallas as pl
from jax.experimental.pallas import tpu as pltpu


def _round_up(x, m):
    return (x + m - 1) // m * m


def _sigmoid(x):
    # One EUP tanh instead of exp + reciprocal.
    return 0.5 * (jnp.tanh(0.5 * x) + 1.0)


# ----------------------------------------------------------------------------
# Fused LSTM + (BN-folded) FC kernel.  Gate order matches nn.LSTM: [i, f, g, o].
# ----------------------------------------------------------------------------
def _lstm_fc_kernel(x_ref, wih_ref, bg_ref, whh_ref, wfc_ref, bfc_ref, o_ref,
                    h_scr, c_scr, xw_scr, hs_scr, *, unroll):
    @pl.when(pl.program_id(1) == 0)          # new batch tile -> reset state
    def _():
        h_scr[...] = jnp.zeros_like(h_scr)
        c_scr[...] = jnp.zeros_like(c_scr)

    Tc, Nb, Hin = x_ref.shape
    Hp = h_scr.shape[-1]
    G4 = 4 * Hp
    Op = o_ref.shape[-1]
    mm_dtype = whh_ref.dtype

    # (a) Chunk input projection: one big GEMM + bias, outside the serial chain.
    x_flat = x_ref[...].reshape(Tc * Nb, Hin)
    xw = jnp.dot(x_flat, wih_ref[...], preferred_element_type=jnp.float32)
    xw_scr[...] = (xw + bg_ref[...]).reshape(Tc, Nb, G4)

    whh = whh_ref[...]                       # (Hp, 4Hp) resident in VMEM

    def one_step(lt, h, c):
        gates = xw_scr[lt] + jnp.dot(
            h.astype(mm_dtype), whh, preferred_element_type=jnp.float32)
        # Hp is a multiple of 128 -> each gate slice is lane aligned.
        i_g = _sigmoid(gates[:, 0 * Hp:1 * Hp])
        f_g = _sigmoid(gates[:, 1 * Hp:2 * Hp])
        g_g = jnp.tanh(gates[:, 2 * Hp:3 * Hp])
        o_g = _sigmoid(gates[:, 3 * Hp:4 * Hp])
        c_new = f_g * c + i_g * g_g
        h_new = o_g * jnp.tanh(c_new)
        hs_scr[lt] = h_new                   # cheap VMEM store; FC is off this path
        return h_new, c_new

    # (b) Serial recurrence: partial unroll (static inner, dynamic outer loop).
    n_outer = Tc // unroll

    def outer(oi, carry):
        h, c = carry
        base = oi * unroll
        for u in range(unroll):
            h, c = one_step(base + u, h, c)
        return h, c

    h_fin, c_fin = lax.fori_loop(0, n_outer, outer, (h_scr[...], c_scr[...]))
    h_scr[...] = h_fin
    c_scr[...] = c_fin

    # (c) Batched (BN-folded) FC for the whole chunk + one lane-dense block store.
    hs = hs_scr[...].reshape(Tc * Nb, Hp).astype(mm_dtype)
    y = jnp.dot(hs, wfc_ref[...], preferred_element_type=jnp.float32) + bfc_ref[...]
    o_ref[...] = y.reshape(Tc, Nb, Op)


def _vmem_limit_bytes(Tc, Nb, Hin, Hp, Op, mm_bytes):
    G4 = 4 * Hp
    io_blocks = 2 * Tc * Nb * Hin * mm_bytes + 2 * Tc * Nb * Op * 4   # dbl-buffered
    weights = 2 * ((Hin + Hp) * G4 * mm_bytes + Hp * Op * mm_bytes + (G4 + Op) * 4)
    scratch = 4 * (2 * Nb * Hp + Tc * Nb * G4 + Tc * Nb * Hp)
    budget = 2 * (io_blocks + weights + scratch) + (16 << 20)         # headroom
    return min(budget, 64 << 20)             # v7x physical VMEM is 64 MiB per TC


def lstm_fc_recurrence(x, w_ih_t, b_gate_row, w_hh_t, w_fc_t, b_fc_row, *,
                       time_chunk, batch_tile, unroll):
    Tp, Np, Hin = x.shape
    G4 = w_ih_t.shape[1]
    Hp = w_hh_t.shape[0]
    Op = w_fc_t.shape[1]
    Tc, Nb = time_chunk, batch_tile
    assert Tp % Tc == 0 and Np % Nb == 0 and Tc % unroll == 0
    mm_bytes = jnp.dtype(x.dtype).itemsize

    return pl.pallas_call(
        functools.partial(_lstm_fc_kernel, unroll=unroll),
        out_shape=jax.ShapeDtypeStruct((Tp, Np, Op), jnp.float32),
        grid=(Np // Nb, Tp // Tc),
        in_specs=[
            pl.BlockSpec((Tc, Nb, Hin), lambda b, t: (t, b, 0)),
            pl.BlockSpec((Hin, G4), lambda b, t: (0, 0)),     # weights stay resident
            pl.BlockSpec((1, G4), lambda b, t: (0, 0)),
            pl.BlockSpec((Hp, G4), lambda b, t: (0, 0)),
            pl.BlockSpec((Hp, Op), lambda b, t: (0, 0)),
            pl.BlockSpec((1, Op), lambda b, t: (0, 0)),
        ],
        out_specs=pl.BlockSpec((Tc, Nb, Op), lambda b, t: (t, b, 0)),
        scratch_shapes=[
            pltpu.VMEM((Nb, Hp), jnp.float32),        # h carry
            pltpu.VMEM((Nb, Hp), jnp.float32),        # c carry
            pltpu.VMEM((Tc, Nb, G4), jnp.float32),    # chunk gate pre-activations
            pltpu.VMEM((Tc, Nb, Hp), jnp.float32),    # chunk h_t buffer
        ],
        compiler_params=pltpu.CompilerParams(
            dimension_semantics=("parallel", "arbitrary"),    # batch sharded on v7x
            vmem_limit_bytes=_vmem_limit_bytes(Tc, Nb, Hin, Hp, Op, mm_bytes)),
    )(x, w_ih_t, b_gate_row, w_hh_t, w_fc_t, b_fc_row)


# ----------------------------------------------------------------------------
# Host-side parameter preparation: fold BN into FC, pad H/O to multiples of 128,
# pre-cast matmul operands to the MXU dtype.
# ----------------------------------------------------------------------------
def prepare_params(params, mm_dtype=jnp.bfloat16):
    H = params["w_hh_t"].shape[0]
    O = params["w_fc_t"].shape[1]
    Hp = _round_up(H, 128)
    Op = _round_up(O, 128)

    # Fold inference BatchNorm into the Linear (== FusedBatchNorm1dLinear.init_fusion).
    eps = 1e-5
    scale = params["bn_gamma"] * lax.rsqrt(params["bn_var"] + eps)          # (H,)
    w_fc = params["w_fc_t"] * scale[:, None]                                # (H, O)
    b_fc = params["b_fc"] + (params["bn_beta"]
                             - params["bn_mean"] * scale) @ params["w_fc_t"]

    # Zero-pad hidden / gate / output dims (exact: padded hidden units stay 0).
    def pad_gate_cols(w):  # (..., 4H) -> (..., 4*Hp), per-gate padding
        lead = w.shape[:-1]
        w = w.reshape(lead + (4, H))
        w = jnp.pad(w, [(0, 0)] * len(lead) + [(0, 0), (0, Hp - H)])
        return w.reshape(lead + (4 * Hp,))

    w_ih_t = pad_gate_cols(params["w_ih_t"])                                # (Hin, 4Hp)
    b_gate = pad_gate_cols((params["b_ih"] + params["b_hh"])[None])[0]      # (4Hp,)
    w_hh_t = pad_gate_cols(params["w_hh_t"])                                # (H, 4Hp)
    w_hh_t = jnp.pad(w_hh_t, [(0, Hp - H), (0, 0)])                         # (Hp, 4Hp)
    w_fc = jnp.pad(w_fc, [(0, Hp - H), (0, Op - O)])                        # (Hp, Op)
    b_fc = jnp.pad(b_fc, [(0, Op - O)])                                     # (Op,)

    return {
        "w_ih_t": w_ih_t.astype(mm_dtype),
        "b_gate_row": b_gate.reshape(1, -1).astype(jnp.float32),
        "w_hh_t": w_hh_t.astype(mm_dtype),
        "w_fc_t": w_fc.astype(mm_dtype),
        "b_fc_row": b_fc.reshape(1, -1).astype(jnp.float32),
    }


def _batch_tiling(N):
    Np8 = _round_up(N, 8)
    if Np8 >= 16:
        n_bt = 2                                     # lets v7x shard the recurrence
        Nb = _round_up((Np8 + n_bt - 1) // n_bt, 8)
    else:
        n_bt = 1
        Nb = Np8
    return Nb, n_bt


# ----------------------------------------------------------------------------
# Full OCRModule forward (mask_padded=False path; seq_len unused).
# ----------------------------------------------------------------------------
@functools.partial(jax.jit, static_argnames=("out_size", "time_chunk", "unroll"))
def ocr_forward(x, seq_len, prepped, out_size, time_chunk=32, unroll=8):
    # TODO(synk): pack_padded_sequence / pad_packed_sequence (mask_padded=True)
    # has no clean Pallas equivalent; this implements the mask_padded=False path.
    del seq_len
    T, N, Hin = x.shape
    mm_dtype = prepped["w_ih_t"].dtype

    U = max(1, min(unroll, time_chunk))
    Tc = _round_up(min(time_chunk, _round_up(T, U)), U)
    Tp = _round_up(T, Tc)
    Nb, n_bt = _batch_tiling(N)
    Np = Nb * n_bt

    x = x.astype(mm_dtype)
    if (Tp, Np) != (T, N):
        # Zero padding: padded batch rows are independent; padded timesteps are
        # sliced off below (the module does not expose the final (h, c) state).
        x = jnp.pad(x, [(0, Tp - T), (0, Np - N), (0, 0)])

    y = lstm_fc_recurrence(
        x, prepped["w_ih_t"], prepped["b_gate_row"], prepped["w_hh_t"],
        prepped["w_fc_t"], prepped["b_fc_row"],
        time_chunk=Tc, batch_tile=Nb, unroll=U)
    return y[:T, :N, :out_size]


# ----------------------------------------------------------------------------
# Pure-JAX f32 reference (explicit, un-folded BN) for correctness checking.
# ----------------------------------------------------------------------------
def ocr_forward_ref(x, params):
    T, N, Hin = x.shape
    H = params["w_hh_t"].shape[0]
    b = params["b_ih"] + params["b_hh"]

    def step(carry, x_t):
        h, c = carry
        gates = x_t @ params["w_ih_t"] + h @ params["w_hh_t"] + b
        i = jax.nn.sigmoid(gates[:, 0 * H:1 * H])
        f = jax.nn.sigmoid(gates[:, 1 * H:2 * H])
        g = jnp.tanh(gates[:, 2 * H:3 * H])
        o = jax.nn.sigmoid(gates[:, 3 * H:4 * H])
        c = f * c + i * g
        h = o * jnp.tanh(c)
        return (h, c), h

    h0 = jnp.zeros((N, H), jnp.float32)
    _, h_seq = lax.scan(step, (h0, h0), x)
    hs = h_seq.reshape(T * N, H)
    xn = (hs - params["bn_mean"]) * lax.rsqrt(params["bn_var"] + 1e-5) \
        * params["bn_gamma"] + params["bn_beta"]
    y = xn @ params["w_fc_t"] + params["b_fc"]
    return y.reshape(T, N, -1)


# ----------------------------------------------------------------------------
# Deterministic parameter construction + example run.
# ----------------------------------------------------------------------------
def make_params(key, target_height, layer_size, output_size):
    ks = jax.random.split(key, 10)
    H, Hin, O = layer_size, target_height, output_size
    scale = 0.1
    return {
        # nn.LSTM params (stored pre-transposed for x @ W layout)
        "w_ih_t": scale * jax.random.normal(ks[0], (Hin, 4 * H), jnp.float32),
        "w_hh_t": scale * jax.random.normal(ks[1], (H, 4 * H), jnp.float32),
        "b_ih": scale * jax.random.normal(ks[2], (4 * H,), jnp.float32),
        "b_hh": scale * jax.random.normal(ks[3], (4 * H,), jnp.float32),
        # BatchNorm1d (inference statistics)
        "bn_gamma": 1.0 + 0.1 * jax.random.normal(ks[4], (H,), jnp.float32),
        "bn_beta": 0.1 * jax.random.normal(ks[5], (H,), jnp.float32),
        "bn_mean": 0.05 * jax.random.normal(ks[6], (H,), jnp.float32),
        "bn_var": jnp.abs(1.0 + 0.1 * jax.random.normal(ks[7], (H,), jnp.float32)),
        # QuantizedLinear ~ Linear (quantization not modeled), pre-transposed
        "w_fc_t": scale * jax.random.normal(ks[8], (H, O), jnp.float32),
        "b_fc": scale * jax.random.normal(ks[9], (O,), jnp.float32),
    }


if __name__ == "__main__":
    T, N = 8, 2                 # sequence length, batch
    target_height = 32          # LSTM input size
    layer_size = 32             # LSTM hidden size
    output_size = 16            # classifier width

    key = jax.random.PRNGKey(0)
    kx, kp = jax.random.split(key)
    x = jax.random.normal(kx, (T, N, target_height), jnp.float32)
    seq_len = jnp.full((N,), T, jnp.int32)
    params = make_params(kp, target_height, layer_size, output_size)

    ref = ocr_forward_ref(x, params)

    # Full-precision MXU path: tight check (validates BN fold + padding + fusion).
    out_f32 = ocr_forward(x, seq_len, prepare_params(params, jnp.float32),
                          out_size=output_size, time_chunk=8, unroll=4)
    out_f32 = jax.block_until_ready(out_f32)
    assert out_f32.shape == (T, N, output_size), out_f32.shape
    assert jnp.allclose(out_f32, ref, atol=2e-4, rtol=2e-4), (
        float(jnp.max(jnp.abs(out_f32 - ref))))

    # bf16 MXU-input / f32-accumulate path (the fast path on v6e/v7x): loose check.
    out_bf16 = ocr_forward(x, seq_len, prepare_params(params, jnp.bfloat16),
                           out_size=output_size)
    out_bf16 = jax.block_until_ready(out_bf16)
    assert out_bf16.shape == (T, N, output_size), out_bf16.shape
    assert jnp.allclose(out_bf16, ref, atol=5e-2, rtol=5e-2), (
        float(jnp.max(jnp.abs(out_bf16 - ref))))

    print("KERNEL_OK")
</pallas_src>

<mosaic_0001>
module attributes {stable_mosaic.version = 11 : i64} {
  func.func @_lstm_fc_kernel(%arg0: i32, %arg1: i32, %arg2: memref<8x8x32xf32, #tpu.memory_space<vmem>>, %arg3: memref<32x512xf32, #tpu.memory_space<vmem>>, %arg4: memref<1x512xf32, #tpu.memory_space<vmem>>, %arg5: memref<128x512xf32, #tpu.memory_space<vmem>>, %arg6: memref<128x128xf32, #tpu.memory_space<vmem>>, %arg7: memref<1x128xf32, #tpu.memory_space<vmem>>, %arg8: memref<8x8x128xf32, #tpu.memory_space<vmem>>, %arg9: memref<8x128xf32, #tpu.memory_space<vmem>>, %arg10: memref<8x128xf32, #tpu.memory_space<vmem>>, %arg11: memref<8x8x512xf32, #tpu.memory_space<vmem>>, %arg12: memref<8x8x128xf32, #tpu.memory_space<vmem>>) attributes {dimension_semantics = [#tpu.dimension_semantics<parallel>, #tpu.dimension_semantics<arbitrary>], iteration_bounds = array<i64: 1, 1>, scalar_prefetch = 0 : i64, scratch_operands = 4 : i64, tpu.core_type = #tpu.core_type<tc>, window_params = [{transform_indices = @transform_0, window_bounds = array<i64: 8, 8, 32>}, {pipeline_mode = #tpu.pipeline_mode<synchronous>, transform_indices = @transform_1, window_bounds = array<i64: 32, 512>}, {pipeline_mode = #tpu.pipeline_mode<synchronous>, transform_indices = @transform_2, window_bounds = array<i64: 1, 512>}, {pipeline_mode = #tpu.pipeline_mode<synchronous>, transform_indices = @transform_3, window_bounds = array<i64: 128, 512>}, {pipeline_mode = #tpu.pipeline_mode<synchronous>, transform_indices = @transform_4, window_bounds = array<i64: 128, 128>}, {pipeline_mode = #tpu.pipeline_mode<synchronous>, transform_indices = @transform_5, window_bounds = array<i64: 1, 128>}, {transform_indices = @transform_6, window_bounds = array<i64: 8, 8, 128>}]} {
    %c0_i32 = arith.constant 0 : i32
    %0 = arith.cmpi eq, %arg1, %c0_i32 : i32
    %1 = arith.extui %0 : i1 to i32
    %c0_i32_0 = arith.constant 0 : i32
    %2 = arith.cmpi ne, %1, %c0_i32_0 : i32
    scf.if %2 {
      %cst_33 = arith.constant 0.000000e+00 : f32
      %28 = vector.broadcast %cst_33 : f32 to vector<8x128xf32>
      %c0_34 = arith.constant 0 : index
      %c0_35 = arith.constant 0 : index
      %29 = vector.load %arg9[%c0_34, %c0_35] : memref<8x128xf32, #tpu.memory_space<vmem>>, vector<8x128xf32>
      tpu.vector_store %arg9[%c0_34, %c0_35], %28 {strides = array<i32>} : memref<8x128xf32, #tpu.memory_space<vmem>>, vector<8x128xf32>,
      %cst_36 = arith.constant 0.000000e+00 : f32
      %30 = vector.broadcast %cst_36 : f32 to vector<8x128xf32>
      %c0_37 = arith.constant 0 : index
      %c0_38 = arith.constant 0 : index
      %31 = vector.load %arg10[%c0_37, %c0_38] : memref<8x128xf32, #tpu.memory_space<vmem>>, vector<8x128xf32>
      tpu.vector_store %arg10[%c0_37, %c0_38], %30 {strides = array<i32>} : memref<8x128xf32, #tpu.memory_space<vmem>>, vector<8x128xf32>,
    } else {
    }
    %c0 = arith.constant 0 : index
    %c0_1 = arith.constant 0 : index
    %c0_2 = arith.constant 0 : index
    %3 = vector.load %arg2[%c0, %c0_1, %c0_2] : memref<8x8x32xf32, #tpu.memory_space<vmem>>, vector<8x8x32xf32>
    %4 = vector.shape_cast %3 : vector<8x8x32xf32> to vector<64x32xf32>
    %c0_3 = arith.constant 0 : index
    %c0_4 = arith.constant 0 : index
    %5 = vector.load %arg3[%c0_3, %c0_4] : memref<32x512xf32, #tpu.memory_space<vmem>>, vector<32x512xf32>
    %cst = arith.constant dense<0.000000e+00> : vector<64x512xf32>
    %6 = tpu.matmul %4, %5, %cst {dimension_numbers = #tpu.dot_dimension_numbers<[1], [0], [0], [1], [0, 0, 1, 1], [], []>} : vector<64x32xf32>, vector<32x512xf32>, vector<64x512xf32> -> vector<64x512xf32>
    %c0_5 = arith.constant 0 : index
    %c0_6 = arith.constant 0 : index
    %7 = vector.load %arg4[%c0_5, %c0_6] : memref<1x512xf32, #tpu.memory_space<vmem>>, vector<1x512xf32>
    %8 = vector.broadcast %7 : vector<1x512xf32> to vector<64x512xf32>
    %9 = arith.addf %6, %8 : vector<64x512xf32>
    %10 = vector.shape_cast %9 : vector<64x512xf32> to vector<8x8x512xf32>
    %c0_7 = arith.constant 0 : index
    %c0_8 = arith.constant 0 : index
    %c0_9 = arith.constant 0 : index
    %11 = vector.load %arg11[%c0_7, %c0_8, %c0_9] : memref<8x8x512xf32, #tpu.memory_space<vmem>>, vector<8x8x512xf32>
    tpu.vector_store %arg11[%c0_7, %c0_8, %c0_9], %10 {strides = array<i32>} : memref<8x8x512xf32, #tpu.memory_space<vmem>>, vector<8x8x512xf32>,
    %c0_10 = arith.constant 0 : index
    %c0_11 = arith.constant 0 : index
    %12 = vector.load %arg5[%c0_10, %c0_11] : memref<128x512xf32, #tpu.memory_space<vmem>>, vector<128x512xf32>
    %c0_12 = arith.constant 0 : index
    %c0_13 = arith.constant 0 : index
    %13 = vector.load %arg9[%c0_12, %c0_13] : memref<8x128xf32, #tpu.memory_space<vmem>>, vector<8x128xf32>
    %c0_14 = arith.constant 0 : index
    %c0_15 = arith.constant 0 : index
    %14 = vector.load %arg10[%c0_14, %c0_15] : memref<8x128xf32, #tpu.memory_space<vmem>>, vector<8x128xf32>
    %c0_i32_16 = arith.constant 0 : i32
    %c2_i32 = arith.constant 2 : i32
    %15 = arith.addi %c0_i32_16, %c2_i32 : i32
    %c1_i32 = arith.constant 1 : i32
    %16:2 = scf.for %arg13 = %c0_i32_16 to %15 step %c1_i32 iter_args(%arg14 = %13, %arg15 = %14) -> (vector<8x128xf32>, vector<8x128xf32>)  : i32 {
      %c4_i32 = arith.constant 4 : i32
      %28 = arith.muli %arg13, %c4_i32 : i32
      %c0_i32_33 = arith.constant 0 : i32
      %29 = arith.addi %28, %c0_i32_33 : i32
      %30 = arith.index_cast %29 : i32 to index
      %c0_34 = arith.constant 0 : index
      %c0_35 = arith.constant 0 : index
      %31 = vector.load %arg11[%30, %c0_34, %c0_35] : memref<8x8x512xf32, #tpu.memory_space<vmem>>, vector<1x8x512xf32>
      %32 = vector.shape_cast %31 : vector<1x8x512xf32> to vector<8x512xf32>
      %cst_36 = arith.constant dense<0.000000e+00> : vector<8x512xf32>
      %33 = tpu.matmul %arg14, %12, %cst_36 {dimension_numbers = #tpu.dot_dimension_numbers<[1], [0], [0], [1], [0, 0, 1, 1], [], []>} : vector<8x128xf32>, vector<128x512xf32>, vector<8x512xf32> -> vector<8x512xf32>
      %34 = arith.addf %32, %33 : vector<8x512xf32>
      %35 = vector.extract_strided_slice %34 {offsets = [0, 0], sizes = [8, 128], strides = [1, 1]} : vector<8x512xf32> to vector<8x128xf32>
      %cst_37 = arith.constant 5.000000e-01 : f32
      %36 = vector.broadcast %cst_37 : f32 to vector<8x128xf32>
      %37 = arith.mulf %36, %35 : vector<8x128xf32>
      %38 = math.tanh %37 : vector<8x128xf32>
      %cst_38 = arith.constant 1.000000e+00 : f32
      %39 = vector.broadcast %cst_38 : f32 to vector<8x128xf32>
      %40 = arith.addf %38, %39 : vector<8x128xf32>
      %cst_39 = arith.constant 5.000000e-01 : f32
      %41 = vector.broadcast %cst_39 : f32 to vector<8x128xf32>
      %42 = arith.mulf %41, %40 : vector<8x128xf32>
      %43 = vector.extract_strided_slice %34 {offsets = [0, 128], sizes = [8, 128], strides = [1, 1]} : vector<8x512xf32> to vector<8x128xf32>
      %cst_40 = arith.constant 5.000000e-01 : f32
      %44 = vector.broadcast %cst_40 : f32 to vector<8x128xf32>
      %45 = arith.mulf %44, %43 : vector<8x128xf32>
      %46 = math.tanh %45 : vector<8x128xf32>
      %cst_41 = arith.constant 1.000000e+00 : f32
      %47 = vector.broadcast %cst_41 : f32 to vector<8x128xf32>
      %48 = arith.addf %46, %47 : vector<8x128xf32>
      %cst_42 = arith.constant 5.000000e-01 : f32
      %49 = vector.broadcast %cst_42 : f32 to vector<8x128xf32>
      %50 = arith.mulf %49, %48 : vector<8x128xf32>
      %51 = vector.extract_strided_slice %34 {offsets = [0, 256], sizes = [8, 128], strides = [1, 1]} : vector<8x512xf32> to vector<8x128xf32>
      %52 = math.tanh %51 : vector<8x128xf32>
      %53 = vector.extract_strided_slice %34 {offsets = [0, 384], sizes = [8, 128], strides = [1, 1]} : vector<8x512xf32> to vector<8x128xf32>
      %cst_43 = arith.constant 5.000000e-01 : f32
      %54 = vector.broadcast %cst_43 : f32 to vector<8x128xf32>
      %55 = arith.mulf %54, %53 : vector<8x128xf32>
      %56 = math.tanh %55 : vector<8x128xf32>
      %cst_44 = arith.constant 1.000000e+00 : f32
      %57 = vector.broadcast %cst_44 : f32 to vector<8x128xf32>
      %58 = arith.addf %56, %57 : vector<8x128xf32>
      %cst_45 = arith.constant 5.000000e-01 : f32
      %59 = vector.broadcast %cst_45 : f32 to vector<8x128xf32>
      %60 = arith.mulf %59, %58 : vector<8x128xf32>
      %61 = arith.mulf %50, %arg15 : vector<8x128xf32>
      %62 = arith.mulf %42, %52 : vector<8x128xf32>
      %63 = arith.addf %61, %62 : vector<8x128xf32>
      %64 = math.tanh %63 : vector<8x128xf32>
      %65 = arith.mulf %60, %64 : vector<8x128xf32>
      %66 = arith.index_cast %29 : i32 to index
      %c0_46 = arith.constant 0 : index
      %c0_47 = arith.constant 0 : index
      %67 = vector.load %arg12[%66, %c0_46, %c0_47] : memref<8x8x128xf32, #tpu.memory_space<vmem>>, vector<1x8x128xf32>
      %68 = vector.shape_cast %67 : vector<1x8x128xf32> to vector<8x128xf32>
      %69 = vector.shape_cast %65 : vector<8x128xf32> to vector<1x8x128xf32>
      tpu.vector_store %arg12[%66, %c0_46, %c0_47], %69 {strides = array<i32>} : memref<8x8x128xf32, #tpu.memory_space<vmem>>, vector<1x8x128xf32>,
      %c1_i32_48 = arith.constant 1 : i32
      %70 = arith.addi %28, %c1_i32_48 : i32
      %71 = arith.index_cast %70 : i32 to index
      %c0_49 = arith.constant 0 : index
      %c0_50 = arith.constant 0 : index
      %72 = vector.load %arg11[%71, %c0_49, %c0_50] : memref<8x8x512xf32, #tpu.memory_space<vmem>>, vector<1x8x512xf32>
      %73 = vector.shape_cast %72 : vector<1x8x512xf32> to vector<8x512xf32>
      %cst_51 = arith.constant dense<0.000000e+00> : vector<8x512xf32>
      %74 = tpu.matmul %65, %12, %cst_51 {dimension_numbers = #tpu.dot_dimension_numbers<[1], [0], [0], [1], [0, 0, 1, 1], [], []>} : vector<8x128xf32>, vector<128x512xf32>, vector<8x512xf32> -> vector<8x512xf32>
      %75 = arith.addf %73, %74 : vector<8x512xf32>
      %76 = vector.extract_strided_slice %75 {offsets = [0, 0], sizes = [8, 128], strides = [1, 1]} : vector<8x512xf32> to vector<8x128xf32>
      %cst_52 = arith.constant 5.000000e-01 : f32
      %77 = vector.broadcast %cst_52 : f32 to vector<8x128xf32>
      %78 = arith.mulf %77, %76 : vector<8x128xf32>
      %79 = math.tanh %78 : vector<8x128xf32>
      %cst_53 = arith.constant 1.000000e+00 : f32
      %80 = vector.broadcast %cst_53 : f32 to vector<8x128xf32>
      %81 = arith.addf %79, %80 : vector<8x128xf32>
      %cst_54 = arith.constant 5.000000e-01 : f32
      %82 = vector.broadcast %cst_54 : f32 to vector<8x128xf32>
      %83 = arith.mulf %82, %81 : vector<8x128xf32>
      %84 = vector.extract_strided_slice %75 {offsets = [0, 128], sizes = [8, 128], strides = [1, 1]} : vector<8x512xf32> to vector<8x128xf32>
      %cst_55 = arith.constant 5.000000e-01 : f32
      %85 = vector.broadcast %cst_55 : f32 to vector<8x128xf32>
      %86 = arith.mulf %85, %84 : vector<8x128xf32>
      %87 = math.tanh %86 : vector<8x128xf32>
      %cst_56 = arith.constant 1.000000e+00 : f32
      %88 = vector.broadcast %cst_56 : f32 to vector<8x128xf32>
      %89 = arith.addf %87, %88 : vector<8x128xf32>
      %cst_57 = arith.constant 5.000000e-01 : f32
      %90 = vector.broadcast %cst_57 : f32 to vector<8x128xf32>
      %91 = arith.mulf %90, %89 : vector<8x128xf32>
      %92 = vector.extract_strided_slice %75 {offsets = [0, 256], sizes = [8, 128], strides = [1, 1]} : vector<8x512xf32> to vector<8x128xf32>
      %93 = math.tanh %92 : vector<8x128xf32>
      %94 = vector.extract_strided_slice %75 {offsets = [0, 384], sizes = [8, 128], strides = [1, 1]} : vector<8x512xf32> to vector<8x128xf32>
      %cst_58 = arith.constant 5.000000e-01 : f32
      %95 = vector.broadcast %cst_58 : f32 to vector<8x128xf32>
      %96 = arith.mulf %95, %94 : vector<8x128xf32>
      %97 = math.tanh %96 : vector<8x128xf32>
      %cst_59 = arith.constant 1.000000e+00 : f32
      %98 = vector.broadcast %cst_59 : f32 to vector<8x128xf32>
      %99 = arith.addf %97, %98 : vector<8x128xf32>
      %cst_60 = arith.constant 5.000000e-01 : f32
      %100 = vector.broadcast %cst_60 : f32 to vector<8x128xf32>
      %101 = arith.mulf %100, %99 : vector<8x128xf32>
      %102 = arith.mulf %91, %63 : vector<8x128xf32>
      %103 = arith.mulf %83, %93 : vector<8x128xf32>
      %104 = arith.addf %102, %103 : vector<8x128xf32>
      %105 = math.tanh %104 : vector<8x128xf32>
      %106 = arith.mulf %101, %105 : vector<8x128xf32>
      %107 = arith.index_cast %70 : i32 to index
      %c0_61 = arith.constant 0 : index
      %c0_62 = arith.constant 0 : index
      %108 = vector.load %arg12[%107, %c0_61, %c0_62] : memref<8x8x128xf32, #tpu.memory_space<vmem>>, vector<1x8x128xf32>
      %109 = vector.shape_cast %108 : vector<1x8x128xf32> to vector<8x128xf32>
      %110 = vector.shape_cast %106 : vector<8x128xf32> to vector<1x8x128xf32>
      tpu.vector_store %arg12[%107, %c0_61, %c0_62], %110 {strides = array<i32>} : memref<8x8x128xf32, #tpu.memory_space<vmem>>, vector<1x8x128xf32>,
      %c2_i32_63 = arith.constant 2 : i32
      %111 = arith.addi %28, %c2_i32_63 : i32
      %112 = arith.index_cast %111 : i32 to index
      %c0_64 = arith.constant 0 : index
      %c0_65 = arith.constant 0 : index
      %113 = vector.load %arg11[%112, %c0_64, %c0_65] : memref<8x8x512xf32, #tpu.memory_space<vmem>>, vector<1x8x512xf32>
      %114 = vector.shape_cast %113 : vector<1x8x512xf32> to vector<8x512xf32>
      %cst_66 = arith.constant dense<0.000000e+00> : vector<8x512xf32>
      %115 = tpu.matmul %106, %12, %cst_66 {dimension_numbers = #tpu.dot_dimension_numbers<[1], [0], [0], [1], [0, 0, 1, 1], [], []>} : vector<8x128xf32>, vector<128x512xf32>, vector<8x512xf32> -> vector<8x512xf32>
      %116 = arith.addf %114, %115 : vector<8x512xf32>
      %117 = vector.extract_strided_slice %116 {offsets = [0, 0], sizes = [8, 128], strides = [1, 1]} : vector<8x512xf32> to vector<8x128xf32>
      %cst_67 = arith.constant 5.000000e-01 : f32
      %118 = vector.broadcast %cst_67 : f32 to vector<8x128xf32>
      %119 = arith.mulf %118, %117 : vector<8x128xf32>
      %120 = math.tanh %119 : vector<8x128xf32>
      %cst_68 = arith.constant 1.000000e+00 : f32
      %121 = vector.broadcast %cst_68 : f32 to vector<8x128xf32>
      %122 = arith.addf %120, %121 : vector<8x128xf32>
      %cst_69 = arith.constant 5.000000e-01 : f32
      %123 = vector.broadcast %cst_69 : f32 to vector<8x128xf32>
      %124 = arith.mulf %123, %122 : vector<8x128xf32>
      %125 = vector.extract_strided_slice %116 {offsets = [0, 128], sizes = [8, 128], strides = [1, 1]} : vector<8x512xf32> to vector<8x128xf32>
      %cst_70 = arith.constant 5.000000e-01 : f32
      %126 = vector.broadcast %cst_70 : f32 to vector<8x128xf32>
      %127 = arith.mulf %126, %125 : vector<8x128xf32>
      %128 = math.tanh %127 : vector<8x128xf32>
      %cst_71 = arith.constant 1.000000e+00 : f32
      %129 = vector.broadcast %cst_71 : f32 to vector<8x128xf32>
      %130 = arith.addf %128, %129 : vector<8x128xf32>
      %cst_72 = arith.constant 5.000000e-01 : f32
      %131 = vector.broadcast %cst_72 : f32 to vector<8x128xf32>
      %132 = arith.mulf %131, %130 : vector<8x128xf32>
      %133 = vector.extract_strided_slice %116 {offsets = [0, 256], sizes = [8, 128], strides = [1, 1]} : vector<8x512xf32> to vector<8x128xf32>
      %134 = math.tanh %133 : vector<8x128xf32>
      %135 = vector.extract_strided_slice %116 {offsets = [0, 384], sizes = [8, 128], strides = [1, 1]} : vector<8x512xf32> to vector<8x128xf32>
      %cst_73 = arith.constant 5.000000e-01 : f32
      %136 = vector.broadcast %cst_73 : f32 to vector<8x128xf32>
      %137 = arith.mulf %136, %135 : vector<8x128xf32>
      %138 = math.tanh %137 : vector<8x128xf32>
      %cst_74 = arith.constant 1.000000e+00 : f32
      %139 = vector.broadcast %cst_74 : f32 to vector<8x128xf32>
      %140 = arith.addf %138, %139 : vector<8x128xf32>
      %cst_75 = arith.constant 5.000000e-01 : f32
      %141 = vector.broadcast %cst_75 : f32 to vector<8x128xf32>
      %142 = arith.mulf %141, %140 : vector<8x128xf32>
      %143 = arith.mulf %132, %104 : vector<8x128xf32>
      %144 = arith.mulf %124, %134 : vector<8x128xf32>
      %145 = arith.addf %143, %144 : vector<8x128xf32>
      %146 = math.tanh %145 : vector<8x128xf32>
      %147 = arith.mulf %142, %146 : vector<8x128xf32>
      %148 = arith.index_cast %111 : i32 to index
      %c0_76 = arith.constant 0 : index
      %c0_77 = arith.constant 0 : index
      %149 = vector.load %arg12[%148, %c0_76, %c0_77] : memref<8x8x128xf32, #tpu.memory_space<vmem>>, vector<1x8x128xf32>
      %150 = vector.shape_cast %149 : vector<1x8x128xf32> to vector<8x128xf32>
      %151 = vector.shape_cast %147 : vector<8x128xf32> to vector<1x8x128xf32>
      tpu.vector_store %arg12[%148, %c0_76, %c0_77], %151 {strides = array<i32>} : memref<8x8x128xf32, #tpu.memory_space<vmem>>, vector<1x8x128xf32>,
      %c3_i32 = arith.constant 3 : i32
      %152 = arith.addi %28, %c3_i32 : i32
      %153 = arith.index_cast %152 : i32 to index
      %c0_78 = arith.constant 0 : index
      %c0_79 = arith.constant 0 : index
      %154 = vector.load %arg11[%153, %c0_78, %c0_79] : memref<8x8x512xf32, #tpu.memory_space<vmem>>, vector<1x8x512xf32>
      %155 = vector.shape_cast %154 : vector<1x8x512xf32> to vector<8x512xf32>
      %cst_80 = arith.constant dense<0.000000e+00> : vector<8x512xf32>
      %156 = tpu.matmul %147, %12, %cst_80 {dimension_numbers = #tpu.dot_dimension_numbers<[1], [0], [0], [1], [0, 0, 1, 1], [], []>} : vector<8x128xf32>, vector<128x512xf32>, vector<8x512xf32> -> vector<8x512xf32>
      %157 = arith.addf %155, %156 : vector<8x512xf32>
      %158 = vector.extract_strided_slice %157 {offsets = [0, 0], sizes = [8, 128], strides = [1, 1]} : vector<8x512xf32> to vector<8x128xf32>
      %cst_81 = arith.constant 5.000000e-01 : f32
      %159 = vector.broadcast %cst_81 : f32 to vector<8x128xf32>
      %160 = arith.mulf %159, %158 : vector<8x128xf32>
      %161 = math.tanh %160 : vector<8x128xf32>
      %cst_82 = arith.constant 1.000000e+00 : f32
      %162 = vector.broadcast %cst_82 : f32 to vector<8x128xf32>
      %163 = arith.addf %161, %162 : vector<8x128xf32>
      %cst_83 = arith.constant 5.000000e-01 : f32
      %164 = vector.broadcast %cst_83 : f32 to vector<8x128xf32>
      %165 = arith.mulf %164, %163 : vector<8x128xf32>
      %166 = vector.extract_strided_slice %157 {offsets = [0, 128], sizes = [8, 128], strides = [1, 1]} : vector<8x512xf32> to vector<8x128xf32>
      %cst_84 = arith.constant 5.000000e-01 : f32
      %167 = vector.broadcast %cst_84 : f32 to vector<8x128xf32>
      %168 = arith.mulf %167, %166 : vector<8x128xf32>
      %169 = math.tanh %168 : vector<8x128xf32>
      %cst_85 = arith.constant 1.000000e+00 : f32
      %170 = vector.broadcast %cst_85 : f32 to vector<8x128xf32>
      %171 = arith.addf %169, %170 : vector<8x128xf32>
      %cst_86 = arith.constant 5.000000e-01 : f32
      %172 = vector.broadcast %cst_86 : f32 to vector<8x128xf32>
      %173 = arith.mulf %172, %171 : vector<8x128xf32>
      %174 = vector.extract_strided_slice %157 {offsets = [0, 256], sizes = [8, 128], strides = [1, 1]} : vector<8x512xf32> to vector<8x128xf32>
      %175 = math.tanh %174 : vector<8x128xf32>
      %176 = vector.extract_strided_slice %157 {offsets = [0, 384], sizes = [8, 128], strides = [1, 1]} : vector<8x512xf32> to vector<8x128xf32>
      %cst_87 = arith.constant 5.000000e-01 : f32
      %177 = vector.broadcast %cst_87 : f32 to vector<8x128xf32>
      %178 = arith.mulf %177, %176 : vector<8x128xf32>
      %179 = math.tanh %178 : vector<8x128xf32>
      %cst_88 = arith.constant 1.000000e+00 : f32
      %180 = vector.broadcast %cst_88 : f32 to vector<8x128xf32>
      %181 = arith.addf %179, %180 : vector<8x128xf32>
      %cst_89 = arith.constant 5.000000e-01 : f32
      %182 = vector.broadcast %cst_89 : f32 to vector<8x128xf32>
      %183 = arith.mulf %182, %181 : vector<8x128xf32>
      %184 = arith.mulf %173, %145 : vector<8x128xf32>
      %185 = arith.mulf %165, %175 : vector<8x128xf32>
      %186 = arith.addf %184, %185 : vector<8x128xf32>
      %187 = math.tanh %186 : vector<8x128xf32>
      %188 = arith.mulf %183, %187 : vector<8x128xf32>
      %189 = arith.index_cast %152 : i32 to index
      %c0_90 = arith.constant 0 : index
      %c0_91 = arith.constant 0 : index
      %190 = vector.load %arg12[%189, %c0_90, %c0_91] : memref<8x8x128xf32, #tpu.memory_space<vmem>>, vector<1x8x128xf32>
      %191 = vector.shape_cast %190 : vector<1x8x128xf32> to vector<8x128xf32>
      %192 = vector.shape_cast %188 : vector<8x128xf32> to vector<1x8x128xf32>
      tpu.vector_store %arg12[%189, %c0_90, %c0_91], %192 {strides = array<i32>} : memref<8x8x128xf32, #tpu.memory_space<vmem>>, vector<1x8x128xf32>,
      scf.yield %188, %186 : vector<8x128xf32>, vector<8x128xf32>
    }
    %c2_i32_17 = arith.constant 2 : i32
    %c0_18 = arith.constant 0 : index
    %c0_19 = arith.constant 0 : index
    %17 = vector.load %arg9[%c0_18, %c0_19] : memref<8x128xf32, #tpu.memory_space<vmem>>, vector<8x128xf32>
    tpu.vector_store %arg9[%c0_18, %c0_19], %16#0 {strides = array<i32>} : memref<8x128xf32, #tpu.memory_space<vmem>>, vector<8x128xf32>,
    %c0_20 = arith.constant 0 : index
    %c0_21 = arith.constant 0 : index
    %18 = vector.load %arg10[%c0_20, %c0_21] : memref<8x128xf32, #tpu.memory_space<vmem>>, vector<8x128xf32>
    tpu.vector_store %arg10[%c0_20, %c0_21], %16#1 {strides = array<i32>} : memref<8x128xf32, #tpu.memory_space<vmem>>, vector<8x128xf32>,
    %c0_22 = arith.constant 0 : index
    %c0_23 = arith.constant 0 : index
    %c0_24 = arith.constant 0 : index
    %19 = vector.load %arg12[%c0_22, %c0_23, %c0_24] : memref<8x8x128xf32, #tpu.memory_space<vmem>>, vector<8x8x128xf32>
    %20 = vector.shape_cast %19 : vector<8x8x128xf32> to vector<64x128xf32>
    %c0_25 = arith.constant 0 : index
    %c0_26 = arith.constant 0 : index
    %21 = vector.load %arg6[%c0_25, %c0_26] : memref<128x128xf32, #tpu.memory_space<vmem>>, vector<128x128xf32>
    %cst_27 = arith.constant dense<0.000000e+00> : vector<64x128xf32>
    %22 = tpu.matmul %20, %21, %cst_27 {dimension_numbers = #tpu.dot_dimension_numbers<[1], [0], [0], [1], [0, 0, 1, 1], [], []>} : vector<64x128xf32>, vector<128x128xf32>, vector<64x128xf32> -> vector<64x128xf32>
    %c0_28 = arith.constant 0 : index
    %c0_29 = arith.constant 0 : index
    %23 = vector.load %arg7[%c0_28, %c0_29] : memref<1x128xf32, #tpu.memory_space<vmem>>, vector<1x128xf32>
    %24 = vector.broadcast %23 : vector<1x128xf32> to vector<64x128xf32>
    %25 = arith.addf %22, %24 : vector<64x128xf32>
    %26 = vector.shape_cast %25 : vector<64x128xf32> to vector<8x8x128xf32>
    %c0_30 = arith.constant 0 : index
    %c0_31 = arith.constant 0 : index
    %c0_32 = arith.constant 0 : index
    %27 = vector.load %arg8[%c0_30, %c0_31, %c0_32] : memref<8x8x128xf32, #tpu.memory_space<vmem>>, vector<8x8x128xf32>
    tpu.vector_store %arg8[%c0_30, %c0_31, %c0_32], %26 {strides = array<i32>} : memref<8x8x128xf32, #tpu.memory_space<vmem>>, vector<8x8x128xf32>,
    return
  }
  func.func @transform_0(%arg0: i32, %arg1: i32) -> (i32, i32, i32) {
    %c0_i32 = arith.constant 0 : i32
    %c0_i32_0 = arith.constant 0 : i32
    return %arg1, %arg0, %c0_i32 : i32, i32, i32
  }
  func.func @transform_1(%arg0: i32, %arg1: i32) -> (i32, i32) {
    %c0_i32 = arith.constant 0 : i32
    %c0_i32_0 = arith.constant 0 : i32
    %c0_i32_1 = arith.constant 0 : i32
    return %c0_i32, %c0_i32_0 : i32, i32
  }
  func.func @transform_2(%arg0: i32, %arg1: i32) -> (i32, i32) {
    %c0_i32 = arith.constant 0 : i32
    %c0_i32_0 = arith.constant 0 : i32
    %c0_i32_1 = arith.constant 0 : i32
    return %c0_i32, %c0_i32_0 : i32, i32
  }
  func.func @transform_3(%arg0: i32, %arg1: i32) -> (i32, i32) {
    %c0_i32 = arith.constant 0 : i32
    %c0_i32_0 = arith.constant 0 : i32
    %c0_i32_1 = arith.constant 0 : i32
    return %c0_i32, %c0_i32_0 : i32, i32
  }
  func.func @transform_4(%arg0: i32, %arg1: i32) -> (i32, i32) {
    %c0_i32 = arith.constant 0 : i32
    %c0_i32_0 = arith.constant 0 : i32
    %c0_i32_1 = arith.constant 0 : i32
    return %c0_i32, %c0_i32_0 : i32, i32
  }
  func.func @transform_5(%arg0: i32, %arg1: i32) -> (i32, i32) {
    %c0_i32 = arith.constant 0 : i32
    %c0_i32_0 = arith.constant 0 : i32
    %c0_i32_1 = arith.constant 0 : i32
    return %c0_i32, %c0_i32_0 : i32, i32
  }
  func.func @transform_6(%arg0: i32, %arg1: i32) -> (i32, i32, i32) {
    %c0_i32 = arith.constant 0 : i32
    %c0_i32_0 = arith.constant 0 : i32
    return %arg1, %arg0, %c0_i32 : i32, i32, i32
  }
}

</mosaic_0001>

<llo_original>
// kernel: ocr_forward.1
$region0: #{ocr_forward.1}
  #allocation0 [shape = 'u32[]', space=smem, size = 0x4, offset = 0x4, fixed_abs, tag = 'smem constant byte address 0x4 - core index']
  #allocation1 [shape = 'u32[144,128]{1,0:T(1,128)}', space=vmem, size = 0x12000, scoped, tag = 'internal scratch']
  #allocation2 [shape = 'f32[8,128]{1,0:T(8,128)}', space=vmem, size = 0x1000, scoped, tag = 'scratch operand']
  #allocation3 [shape = 'f32[8,128]{1,0:T(8,128)}', space=vmem, size = 0x1000, scoped, tag = 'scratch operand']
  #allocation4 [shape = 'f32[8,8,512]{2,1,0:T(8,128)}', space=vmem, size = 0x20000, scoped, tag = 'scratch operand']
  #allocation5 [shape = 'f32[8,8,128]{2,1,0:T(8,128)}', space=vmem, size = 0x8000, scoped, tag = 'scratch operand']
  %s0 = inlined_call_operand.vmem [shape: f32[8,8,32], index: 0, kind: input, shape index: {}]
  %s1 = inlined_call_operand.hbm [shape: f32[32,512], index: 1, kind: input, shape index: {}]
  %s2 = inlined_call_operand.vmem [shape: f32[1,512], index: 2, kind: input, shape index: {}]
  %s3 = inlined_call_operand.hbm [shape: f32[128,512], index: 3, kind: input, shape index: {}]
  %s4 = inlined_call_operand.hbm [shape: f32[128,128], index: 4, kind: input, shape index: {}]
  %s5 = inlined_call_operand.vmem [shape: f32[1,128], index: 5, kind: input, shape index: {}]
  %s6 = inlined_call_operand.vmem [shape: f32[8,8,128], index: 6, kind: output, shape index: {}]
  %s7 = sld [smem:[#allocation0]]
  $region57: #{ocr_forward.1} parent=0
    _
  %s9 = ssub.s32 1, %s7
  %s10 = scalar_select 0, %s9, %s7
  $region1: #{ocr_forward.1} parent=0
    #allocation6 [shape = 'u8[65536]{0}', space=vmem, size = 0x10000, scoped, tag = 'input window, operand 1, single buffered']
    #allocation7 [shape = 's32[1]{0}', space=sflag, size = 0x4, scoped, tag = 'scoped memory for ocr_forward.1']
    #allocation8 [shape = 'u8[262144]{0}', space=vmem, size = 0x40000, scoped, tag = 'input window, operand 3, single buffered']
    #allocation9 [shape = 's32[1]{0}', space=sflag, size = 0x4, scoped, tag = 'scoped memory for ocr_forward.1']
    #allocation10 [shape = 'u8[65536]{0}', space=vmem, size = 0x10000, scoped, tag = 'input window, operand 4, single buffered']
    %11 = vsyncpa [#allocation7], 0
    %12 = vsyncpa [#allocation9], 0
    // Predicated region
    $region2: #{ocr_forward.1} parent=1 // pred_check
      _
    $region3: #{ocr_forward.1} parent=1 // pred_check_branch
      %14 = sbr.rel (0) target = $region5
    $region4: #{ocr_forward.1} parent=1 // pred_region
      _
    $region5: #{ocr_forward.1} parent=1 // pred_fallthru
      _
    // Predicated region
    $region6: #{ocr_forward.1} parent=1 // pred_check
      _
    $region7: #{ocr_forward.1} parent=1 // pred_check_branch
      %16 = sbr.rel (0) target = $region9
    $region8: #{ocr_forward.1} parent=1 // pred_region
      %s18 = ssub.s32 2048, 2048
      %19 = vsyncadd [#allocation7], %s18
      %s20 = sshll.u32 [#allocation6], 4
      %s21 = int_to_ptr.vmem [resolvable:$true] %s20
      %26 = dma.hbm_to_vmem [thread:$0]  %s1, 2048, %s21, [#allocation7], 512, 512, 32
    $region9: #{ocr_forward.1} parent=1 // pred_fallthru
      _
    // Predicated region
    $region10: #{ocr_forward.1} parent=1 // pred_check
      _
    $region11: #{ocr_forward.1} parent=1 // pred_check_branch
      %28 = sbr.rel (0) target = $region13
    $region12: #{ocr_forward.1} parent=1 // pred_region
      _
    $region13: #{ocr_forward.1} parent=1 // pred_fallthru
      _
    // Predicated region
    $region14: #{ocr_forward.1} parent=1 // pred_check
      _
    $region15: #{ocr_forward.1} parent=1 // pred_check_branch
      %30 = sbr.rel (0) target = $region17
    $region16: #{ocr_forward.1} parent=1 // pred_region
      %s32 = ssub.s32 8192, 8192
      %33 = vsyncadd [#allocation9], %s32
      %s34 = sshll.u32 [#allocation8], 4
      %s35 = int_to_ptr.vmem [resolvable:$true] %s34
      %40 = dma.hbm_to_vmem [thread:$0]  %s3, 8192, %s35, [#allocation9], 512, 512, 32
    $region17: #{ocr_forward.1} parent=1 // pred_fallthru
      _
    // Predicated region
    $region18: #{ocr_forward.1} parent=1 // pred_check
      _
    $region19: #{ocr_forward.1} parent=1 // pred_check_branch
      %42 = sbr.rel (0) target = $region21
    $region20: #{ocr_forward.1} parent=1 // pred_region
      %s44 = ssub.s32 2048, 2048
      %45 = vsyncadd [#allocation9], %s44
      %s46 = sshll.u32 [#allocation10], 4
      %s47 = int_to_ptr.vmem [resolvable:$true] %s46
      %52 = dma.hbm_to_vmem [thread:$0]  %s4, 2048, %s47, [#allocation9], 128, 128, 8
    $region21: #{ocr_forward.1} parent=1 // pred_fallthru
      _
    // Predicated region
    $region22: #{ocr_forward.1} parent=1 // pred_check
      _
    $region23: #{ocr_forward.1} parent=1 // pred_check_branch
      %54 = sbr.rel (0) target = $region25
    $region24: #{ocr_forward.1} parent=1 // pred_region
      _
    $region25: #{ocr_forward.1} parent=1 // pred_fallthru
      _
    // Predicated region
    $region26: #{ocr_forward.1} parent=1 // pred_check
      _
    $region27: #{ocr_forward.1} parent=1 // pred_check_branch
      %56 = sbr.rel (0) target = $region29
    $region28: #{ocr_forward.1} parent=1 // pred_region
      %57 = dma.done [#allocation7], 2048
    $region29: #{ocr_forward.1} parent=1 // pred_fallthru
      _
    // Predicated region
    $region30: #{ocr_forward.1} parent=1 // pred_check
      _
    $region31: #{ocr_forward.1} parent=1 // pred_check_branch
      %59 = sbr.rel (0) target = $region33
    $region32: #{ocr_forward.1} parent=1 // pred_region
      %60 = dma.done [#allocation9], 8192
    $region33: #{ocr_forward.1} parent=1 // pred_fallthru
      _
    // Predicated region
    $region34: #{ocr_forward.1} parent=1 // pred_check
      _
    $region35: #{ocr_forward.1} parent=1 // pred_check_branch
      %62 = sbr.rel (0) target = $region37
    $region36: #{ocr_forward.1} parent=1 // pred_region
      %63 = dma.done [#allocation9], 2048
    $region37: #{ocr_forward.1} parent=1 // pred_fallthru
      _
    %p64 = scmp.eq.s32.totalorder 0, 0
    // Predicated region
    $region38: #{ocr_forward.1} parent=1 // pred_check
      %p65 = pneg %p64
    $region39: #{ocr_forward.1} parent=1 // pred_check_branch
      %67 = sbr.rel (%p65) target = $region41
    $region40: #{ocr_forward.1} parent=1 // pred_region
      %68 = vst [vmem:[#allocation2] sm:$0xff] 0.0
      %69 = vst [vmem:[#allocation3] sm:$0xff] 0.0
    $region41: #{ocr_forward.1} parent=1 // pred_fallthru
      _
    %v70 = vld [vmem:[%s0] sm:$0xff]
    %v71 = vld [vmem:[%s0 + $0x8] sm:$0xff]
    %v72 = vld [vmem:[%s0 + $0x10] sm:$0xff]
    %v73 = vld [vmem:[%s0 + $0x18] sm:$0xff]
    %v74 = vld [vmem:[%s0 + $0x20] sm:$0xff]
    %v75 = vld [vmem:[%s0 + $0x28] sm:$0xff]
    %v76 = vld [vmem:[%s0 + $0x30] sm:$0xff]
    %v77 = vld [vmem:[%s0 + $0x38] sm:$0xff]
    %v78 = vld [vmem:[#allocation6] sm:$0xff]
    %v79 = vld [vmem:[#allocation6 + $0x8] sm:$0xff]
    %v80 = vld [vmem:[#allocation6 + $0x10] sm:$0xff]
    %v81 = vld [vmem:[#allocation6 + $0x18] sm:$0xff]
    %v82 = vld [vmem:[#allocation6 + $0x20] sm:$0xff]
    %v83 = vld [vmem:[#allocation6 + $0x28] sm:$0xff]
    %v84 = vld [vmem:[#allocation6 + $0x30] sm:$0xff]
    %v85 = vld [vmem:[#allocation6 + $0x38] sm:$0xff]
    %v86 = vld [vmem:[#allocation6 + $0x40] sm:$0xff]
    %v87 = vld [vmem:[#allocation6 + $0x48] sm:$0xff]
    %v88 = vld [vmem:[#allocation6 + $0x50] sm:$0xff]
    %v89 = vld [vmem:[#allocation6 + $0x58] sm:$0xff]
    %v90 = vld [vmem:[#allocation6 + $0x60] sm:$0xff]
    %v91 = vld [vmem:[#allocation6 + $0x68] sm:$0xff]
    %v92 = vld [vmem:[#allocation6 + $0x70] sm:$0xff]
    %v93 = vld [vmem:[#allocation6 + $0x78] sm:$0xff]
    %v94 = vld [vmem:[%s2] sm:$0xf]
    %v96 = vlaneseq
    %v97 = vshrl.u32 %v96, 7
    %v98 = vsub.s32 0, %v97
    %v99 = vrot.slane %v94, %v98
    %v100 = vlaneseq
    %v101 = vshrl.u32 %v100, 7
    %v102 = vsub.s32 1, %v101
    %v103 = vrot.slane %v94, %v102
    %v104 = vlaneseq
    %v105 = vshrl.u32 %v104, 7
    %v106 = vsub.s32 2, %v105
    %v107 = vrot.slane %v94, %v106
    %v108 = vlaneseq
    %v109 = vshrl.u32 %v108, 7
    %v110 = vsub.s32 3, %v109
    %v111 = vrot.slane %v94, %v110
    %vm116 = vcmask 261120
    %v118 = vsel %vm116, %v70, 0
    %v121 = vsel %vm116, %v71, 0
    %v124 = vsel %vm116, %v72, 0
    %v127 = vsel %vm116, %v73, 0
    %v130 = vsel %vm116, %v74, 0
    %v133 = vsel %vm116, %v75, 0
    %v136 = vsel %vm116, %v76, 0
    %v139 = vsel %vm116, %v77, 0
    %141 = vmatprep.subr.mxu0 0.0
    %142 = vmatpush1.msra.mxu0 0.0
    %143 = vmatprep.subr.mxu0 0.0
    %144 = vmatpush1.msra.mxu0 0.0
    %145 = vmatprep.subr.mxu0 0.0
    %146 = vmatpush1.msra.mxu0 0.0
    %147 = vmatprep.subr.mxu0 0.0
    %148 = vmatpush1.msra.mxu0 0.0
    %149 = vmatprep.subr.mxu0 0.0
    %150 = vmatpush1.msra.mxu0 0.0
    %151 = vmatprep.subr.mxu0 0.0
    %152 = vmatpush1.msra.mxu0 0.0
    %153 = vmatprep.subr.mxu0 0.0
    %154 = vmatpush1.msra.mxu0 0.0
    %155 = vmatprep.subr.mxu0 0.0
    %156 = vmatpush1.msra.mxu0 0.0
    %157 = vmatprep.subr.mxu0 0.0
    %158 = vmatpush1.msra.mxu0 0.0
    %159 = vmatprep.subr.mxu0 0.0
    %160 = vmatpush1.msra.mxu0 0.0
    %161 = vmatprep.subr.mxu0 0.0
    %162 = vmatpush1.msra.mxu0 0.0
    %163 = vmatprep.subr.mxu0 0.0
    %164 = vmatpush1.msra.mxu0 0.0
    %165 = vmatprep.subr.mxu0 %v91
    %166 = vmatpush1.msra.mxu0 %v90
    %167 = vmatprep.subr.mxu0 %v87
    %168 = vmatpush1.msra.mxu0 %v86
    %169 = vmatprep.subr.mxu0 %v83
    %170 = vmatpush1.msra.mxu0 %v82
    %171 = vmatprep.subr.mxu0 %v79
    %172 = vmatpush1.msra.mxu0 %v78
    %173 = vmatprep.subr.mxu0 0.0
    %174 = vmatpush2.msra.mxu0 0.0
    %175 = vmatprep.subr.mxu0 0.0
    %176 = vmatpush2.msra.mxu0 0.0
    %177 = vmatprep.subr.mxu0 0.0
    %178 = vmatpush2.msra.mxu0 0.0
    %179 = vmatprep.subr.mxu0 0.0
    %180 = vmatpush2.msra.mxu0 0.0
    %181 = vmatprep.subr.mxu0 0.0
    %182 = vmatpush2.msra.mxu0 0.0
    %183 = vmatprep.subr.mxu0 0.0
    %184 = vmatpush2.msra.mxu0 0.0
    %185 = vmatprep.subr.mxu0 0.0
    %186 = vmatpush2.msra.mxu0 0.0
    %187 = vmatprep.subr.mxu0 0.0
    %188 = vmatpush2.msra.mxu0 0.0
    %189 = vmatprep.subr.mxu0 0.0
    %190 = vmatpush2.msra.mxu0 0.0
    %191 = vmatprep.subr.mxu0 0.0
    %192 = vmatpush2.msra.mxu0 0.0
    %193 = vmatprep.subr.mxu0 0.0
    %194 = vmatpush2.msra.mxu0 0.0
    %195 = vmatprep.subr.mxu0 0.0
    %196 = vmatpush2.msra.mxu0 0.0
    %197 = vmatprep.subr.mxu0 0.0
    %198 = vmatpush2.msra.mxu0 0.0
    %199 = vmatprep.subr.mxu0 0.0
    %200 = vmatpush2.msra.mxu0 0.0
    %201 = vmatprep.subr.mxu0 0.0
    %202 = vmatpush2.msra.mxu0 0.0
    %203 = vmatprep.subr.mxu0 0.0
    %204 = vmatpush2.msra.mxu0 0.0
    %205 = vmatprep.mubr.f32.mxu0 0.0
    %206 = vmatmul.mubr.f32.gmra.mxu0 %v118
    %v207 = vpop.f32.mrf.mxu0
    %v208 = vadd.f32 %v99, %v207
    %v209 = vpop.f32.mrf.mxu0
    %v210 = vadd.f32 %v103, %v209
    %211 = vmatprep.mubr.f32.mxu0 0.0
    %212 = vmatmul.mubr.f32.gmra.mxu0 %v121
    %v213 = vpop.f32.mrf.mxu0
    %v214 = vadd.f32 %v99, %v213
    %v215 = vpop.f32.mrf.mxu0
    %v216 = vadd.f32 %v103, %v215
    %217 = vmatprep.mubr.f32.mxu0 0.0
    %218 = vmatmul.mubr.f32.gmra.mxu0 %v124
    %v219 = vpop.f32.mrf.mxu0
    %v220 = vadd.f32 %v99, %v219
    %v221 = vpop.f32.mrf.mxu0
    %v222 = vadd.f32 %v103, %v221
    %223 = vmatprep.mubr.f32.mxu0 0.0
    %224 = vmatmul.mubr.f32.gmra.mxu0 %v127
    %v225 = vpop.f32.mrf.mxu0
    %v226 = vadd.f32 %v99, %v225
    %v227 = vpop.f32.mrf.mxu0
    %v228 = vadd.f32 %v103, %v227
    %229 = vmatprep.mubr.f32.mxu0 0.0
    %230 = vmatmul.mubr.f32.gmra.mxu0 %v130
    %v231 = vpop.f32.mrf.mxu0
    %v232 = vadd.f32 %v99, %v231
    %v233 = vpop.f32.mrf.mxu0
    %v234 = vadd.f32 %v103, %v233
    %235 = vmatprep.mubr.f32.mxu0 0.0
    %236 = vmatmul.mubr.f32.gmra.mxu0 %v133
    %v237 = vpop.f32.mrf.mxu0
    %v238 = vadd.f32 %v99, %v237
    %v239 = vpop.f32.mrf.mxu0
    %v240 = vadd.f32 %v103, %v239
    %241 = vmatprep.mubr.f32.mxu0 0.0
    %242 = vmatmul.mubr.f32.gmra.mxu0 %v136
    %v243 = vpop.f32.mrf.mxu0
    %v244 = vadd.f32 %v99, %v243
    %v245 = vpop.f32.mrf.mxu0
    %v246 = vadd.f32 %v103, %v245
    %247 = vmatprep.mubr.f32.mxu0 0.0
    %248 = vmatmul.mubr.f32.gmra.mxu0 %v139
    %v249 = vpop.f32.mrf.mxu0
    %v250 = vadd.f32 %v99, %v249
    %v251 = vpop.f32.mrf.mxu0
    %v252 = vadd.f32 %v103, %v251
    %253 = vdwg.mxu0
    %254 = vmatprep.subr.mxu0 0.0
    %255 = vmatpush1.msra.mxu0 0.0
    %256 = vmatprep.subr.mxu0 0.0
    %257 = vmatpush1.msra.mxu0 0.0
    %258 = vmatprep.subr.mxu0 0.0
    %259 = vmatpush1.msra.mxu0 0.0
    %260 = vmatprep.subr.mxu0 0.0
    %261 = vmatpush1.msra.mxu0 0.0
    %262 = vmatprep.subr.mxu0 0.0
    %263 = vmatpush1.msra.mxu0 0.0
    %264 = vmatprep.subr.mxu0 0.0
    %265 = vmatpush1.msra.mxu0 0.0
    %266 = vmatprep.subr.mxu0 0.0
    %267 = vmatpush1.msra.mxu0 0.0
    %268 = vmatprep.subr.mxu0 0.0
    %269 = vmatpush1.msra.mxu0 0.0
    %270 = vmatprep.subr.mxu0 0.0
    %271 = vmatpush1.msra.mxu0 0.0
    %272 = vmatprep.subr.mxu0 0.0
    %273 = vmatpush1.msra.mxu0 0.0
    %274 = vmatprep.subr.mxu0 0.0
    %275 = vmatpush1.msra.mxu0 0.0
    %276 = vmatprep.subr.mxu0 0.0
    %277 = vmatpush1.msra.mxu0 0.0
    %278 = vmatprep.subr.mxu0 %v93
    %279 = vmatpush1.msra.mxu0 %v92
    %280 = vmatprep.subr.mxu0 %v89
    %281 = vmatpush1.msra.mxu0 %v88
    %282 = vmatprep.subr.mxu0 %v85
    %283 = vmatpush1.msra.mxu0 %v84
    %284 = vmatprep.subr.mxu0 %v81
    %285 = vmatpush1.msra.mxu0 %v80
    %286 = vmatprep.subr.mxu0 0.0
    %287 = vmatpush2.msra.mxu0 0.0
    %288 = vmatprep.subr.mxu0 0.0
    %289 = vmatpush2.msra.mxu0 0.0
    %290 = vmatprep.subr.mxu0 0.0
    %291 = vmatpush2.msra.mxu0 0.0
    %292 = vmatprep.subr.mxu0 0.0
    %293 = vmatpush2.msra.mxu0 0.0
    %294 = vmatprep.subr.mxu0 0.0
    %295 = vmatpush2.msra.mxu0 0.0
    %296 = vmatprep.subr.mxu0 0.0
    %297 = vmatpush2.msra.mxu0 0.0
    %298 = vmatprep.subr.mxu0 0.0
    %299 = vmatpush2.msra.mxu0 0.0
    %300 = vmatprep.subr.mxu0 0.0
    %301 = vmatpush2.msra.mxu0 0.0
    %302 = vmatprep.subr.mxu0 0.0
    %303 = vmatpush2.msra.mxu0 0.0
    %304 = vmatprep.subr.mxu0 0.0
    %305 = vmatpush2.msra.mxu0 0.0
    %306 = vmatprep.subr.mxu0 0.0
    %307 = vmatpush2.msra.mxu0 0.0
    %308 = vmatprep.subr.mxu0 0.0
    %309 = vmatpush2.msra.mxu0 0.0
    %310 = vmatprep.subr.mxu0 0.0
    %311 = vmatpush2.msra.mxu0 0.0
    %312 = vmatprep.subr.mxu0 0.0
    %313 = vmatpush2.msra.mxu0 0.0
    %314 = vmatprep.subr.mxu0 0.0
    %315 = vmatpush2.msra.mxu0 0.0
    %316 = vmatprep.subr.mxu0 0.0
    %317 = vmatpush2.msra.mxu0 0.0
    %318 = vmatprep.mubr.f32.mxu0 0.0
    %319 = vmatmul.mubr.f32.gmra.mxu0 %v118
    %v320 = vpop.f32.mrf.mxu0
    %v321 = vadd.f32 %v107, %v320
    %v322 = vpop.f32.mrf.mxu0
    %v323 = vadd.f32 %v111, %v322
    %324 = vmatprep.mubr.f32.mxu0 0.0
    %325 = vmatmul.mubr.f32.gmra.mxu0 %v121
    %v326 = vpop.f32.mrf.mxu0
    %v327 = vadd.f32 %v107, %v326
    %v328 = vpop.f32.mrf.mxu0
    %v329 = vadd.f32 %v111, %v328
    %330 = vmatprep.mubr.f32.mxu0 0.0
    %331 = vmatmul.mubr.f32.gmra.mxu0 %v124
    %v332 = vpop.f32.mrf.mxu0
    %v333 = vadd.f32 %v107, %v332
    %v334 = vpop.f32.mrf.mxu0
    %v335 = vadd.f32 %v111, %v334
    %336 = vmatprep.mubr.f32.mxu0 0.0
    %337 = vmatmul.mubr.f32.gmra.mxu0 %v127
    %v338 = vpop.f32.mrf.mxu0
    %v339 = vadd.f32 %v107, %v338
    %v340 = vpop.f32.mrf.mxu0
    %v341 = vadd.f32 %v111, %v340
    %342 = vmatprep.mubr.f32.mxu0 0.0
    %343 = vmatmul.mubr.f32.gmra.mxu0 %v130
    %v344 = vpop.f32.mrf.mxu0
    %v345 = vadd.f32 %v107, %v344
    %v346 = vpop.f32.mrf.mxu0
    %v347 = vadd.f32 %v111, %v346
    %348 = vmatprep.mubr.f32.mxu0 0.0
    %349 = vmatmul.mubr.f32.gmra.mxu0 %v133
    %v350 = vpop.f32.mrf.mxu0
    %v351 = vadd.f32 %v107, %v350
    %v352 = vpop.f32.mrf.mxu0
    %v353 = vadd.f32 %v111, %v352
    %354 = vmatprep.mubr.f32.mxu0 0.0
    %355 = vmatmul.mubr.f32.gmra.mxu0 %v136
    %v356 = vpop.f32.mrf.mxu0
    %v357 = vadd.f32 %v107, %v356
    %v358 = vpop.f32.mrf.mxu0
    %v359 = vadd.f32 %v111, %v358
    %360 = vmatprep.mubr.f32.mxu0 0.0
    %361 = vmatmul.mubr.f32.gmra.mxu0 %v139
    %v362 = vpop.f32.mrf.mxu0
    %v363 = vadd.f32 %v107, %v362
    %v364 = vpop.f32.mrf.mxu0
    %v365 = vadd.f32 %v111, %v364
    %366 = vdwg.mxu0
    %367 = vst [vmem:[#allocation4] sm:$0xff] %v208
    %368 = vst [vmem:[#allocation4 + $0x8] sm:$0xff] %v210
    %369 = vst [vmem:[#allocation4 + $0x10] sm:$0xff] %v321
    %370 = vst [vmem:[#allocation4 + $0x18] sm:$0xff] %v323
    %371 = vst [vmem:[#allocation4 + $0x20] sm:$0xff] %v214
    %372 = vst [vmem:[#allocation4 + $0x28] sm:$0xff] %v216
    %373 = vst [vmem:[#allocation4 + $0x30] sm:$0xff] %v327
    %374 = vst [vmem:[#allocation4 + $0x38] sm:$0xff] %v329
    %375 = vst [vmem:[#allocation4 + $0x40] sm:$0xff] %v220
    %376 = vst [vmem:[#allocation4 + $0x48] sm:$0xff] %v222
    %377 = vst [vmem:[#allocation4 + $0x50] sm:$0xff] %v333
    %378 = vst [vmem:[#allocation4 + $0x58] sm:$0xff] %v335
    %379 = vst [vmem:[#allocation4 + $0x60] sm:$0xff] %v226
    %380 = vst [vmem:[#allocation4 + $0x68] sm:$0xff] %v228
    %381 = vst [vmem:[#allocation4 + $0x70] sm:$0xff] %v339
    %382 = vst [vmem:[#allocation4 + $0x78] sm:$0xff] %v341
    %383 = vst [vmem:[#allocation4 + $0x80] sm:$0xff] %v232
    %384 = vst [vmem:[#allocation4 + $0x88] sm:$0xff] %v234
    %385 = vst [vmem:[#allocation4 + $0x90] sm:$0xff] %v345
    %386 = vst [vmem:[#allocation4 + $0x98] sm:$0xff] %v347
    %387 = vst [vmem:[#allocation4 + $0xa0] sm:$0xff] %v238
    %388 = vst [vmem:[#allocation4 + $0xa8] sm:$0xff] %v240
    %389 = vst [vmem:[#allocation4 + $0xb0] sm:$0xff] %v351
    %390 = vst [vmem:[#allocation4 + $0xb8] sm:$0xff] %v353
    %391 = vst [vmem:[#allocation4 + $0xc0] sm:$0xff] %v244
    %392 = vst [vmem:[#allocation4 + $0xc8] sm:$0xff] %v246
    %393 = vst [vmem:[#allocation4 + $0xd0] sm:$0xff] %v357
    %394 = vst [vmem:[#allocation4 + $0xd8] sm:$0xff] %v359
    %395 = vst [vmem:[#allocation4 + $0xe0] sm:$0xff] %v250
    %396 = vst [vmem:[#allocation4 + $0xe8] sm:$0xff] %v252
    %397 = vst [vmem:[#allocation4 + $0xf0] sm:$0xff] %v363
    %398 = vst [vmem:[#allocation4 + $0xf8] sm:$0xff] %v365
    %v399 = vld [vmem:[#allocation8] sm:$0xff]
    %v400 = vld [vmem:[#allocation8 + $0x8] sm:$0xff]
    %v401 = vld [vmem:[#allocation8 + $0x10] sm:$0xff]
    %v402 = vld [vmem:[#allocation8 + $0x18] sm:$0xff]
    %v403 = vld [vmem:[#allocation8 + $0x20] sm:$0xff]
    %v404 = vld [vmem:[#allocation8 + $0x28] sm:$0xff]
    %v405 = vld [vmem:[#allocation8 + $0x30] sm:$0xff]
    %v406 = vld [vmem:[#allocation8 + $0x38] sm:$0xff]
    %v407 = vld [vmem:[#allocation8 + $0x40] sm:$0xff]
    %v408 = vld [vmem:[#allocation8 + $0x48] sm:$0xff]
    %v409 = vld [vmem:[#allocation8 + $0x50] sm:$0xff]
    %v410 = vld [vmem:[#allocation8 + $0x58] sm:$0xff]
    %v411 = vld [vmem:[#allocation8 + $0x60] sm:$0xff]
    %v412 = vld [vmem:[#allocation8 + $0x68] sm:$0xff]
    %v413 = vld [vmem:[#allocation8 + $0x70] sm:$0xff]
    %v414 = vld [vmem:[#allocation8 + $0x78] sm:$0xff]
    %v415 = vld [vmem:[#allocation8 + $0x80] sm:$0xff]
    %v416 = vld [vmem:[#allocation8 + $0x88] sm:$0xff]
    %v417 = vld [vmem:[#allocation8 + $0x90] sm:$0xff]
    %v418 = vld [vmem:[#allocation8 + $0x98] sm:$0xff]
    %v419 = vld [vmem:[#allocation8 + $0xa0] sm:$0xff]
    %v420 = vld [vmem:[#allocation8 + $0xa8] sm:$0xff]
    %v421 = vld [vmem:[#allocation8 + $0xb0] sm:$0xff]
    %v422 = vld [vmem:[#allocation8 + $0xb8] sm:$0xff]
    %v423 = vld [vmem:[#allocation8 + $0xc0] sm:$0xff]
    %v424 = vld [vmem:[#allocation8 + $0xc8] sm:$0xff]
    %v425 = vld [vmem:[#allocation8 + $0xd0] sm:$0xff]
    %v426 = vld [vmem:[#allocation8 + $0xd8] sm:$0xff]
    %v427 = vld [vmem:[#allocation8 + $0xe0] sm:$0xff]
    %v428 = vld [vmem:[#allocation8 + $0xe8] sm:$0xff]
    %v429 = vld [vmem:[#allocation8 + $0xf0] sm:$0xff]
    %v430 = vld [vmem:[#allocation8 + $0xf8] sm:$0xff]
    %v431 = vld [vmem:[#allocation8 + $0x100] sm:$0xff]
    %v432 = vld [vmem:[#allocation8 + $0x108] sm:$0xff]
    %v433 = vld [vmem:[#allocation8 + $0x110] sm:$0xff]
    %v434 = vld [vmem:[#allocation8 + $0x118] sm:$0xff]
    %v435 = vld [vmem:[#allocation8 + $0x120] sm:$0xff]
    %v436 = vld [vmem:[#allocation8 + $0x128] sm:$0xff]
    %v437 = vld [vmem:[#allocation8 + $0x130] sm:$0xff]
    %v438 = vld [vmem:[#allocation8 + $0x138] sm:$0xff]
    %v439 = vld [vmem:[#allocation8 + $0x140] sm:$0xff]
    %v440 = vld [vmem:[#allocation8 + $0x148] sm:$0xff]
    %v441 = vld [vmem:[#allocation8 + $0x150] sm:$0xff]
    %v442 = vld [vmem:[#allocation8 + $0x158] sm:$0xff]
    %v443 = vld [vmem:[#allocation8 + $0x160] sm:$0xff]
    %v444 = vld [vmem:[#allocation8 + $0x168] sm:$0xff]
    %v445 = vld [vmem:[#allocation8 + $0x170] sm:$0xff]
    %v446 = vld [vmem:[#allocation8 + $0x178] sm:$0xff]
    %v447 = vld [vmem:[#allocation8 + $0x180] sm:$0xff]
    %v448 = vld [vmem:[#allocation8 + $0x188] sm:$0xff]
    %v449 = vld [vmem:[#allocation8 + $0x190] sm:$0xff]
    %v450 = vld [vmem:[#allocation8 + $0x198] sm:$0xff]
    %v451 = vld [vmem:[#allocation8 + $0x1a0] sm:$0xff]
    %v452 = vld [vmem:[#allocation8 + $0x1a8] sm:$0xff]
    %v453 = vld [vmem:[#allocation8 + $0x1b0] sm:$0xff]
    %v454 = vld [vmem:[#allocation8 + $0x1b8] sm:$0xff]
    %v455 = vld [vmem:[#allocation8 + $0x1c0] sm:$0xff]
    %v456 = vld [vmem:[#allocation8 + $0x1c8] sm:$0xff]
    %v457 = vld [vmem:[#allocation8 + $0x1d0] sm:$0xff]
    %v458 = vld [vmem:[#allocation8 + $0x1d8] sm:$0xff]
    %v459 = vld [vmem:[#allocation8 + $0x1e0] sm:$0xff]
    %v460 = vld [vmem:[#allocation8 + $0x1e8] sm:$0xff]
    %v461 = vld [vmem:[#allocation8 + $0x1f0] sm:$0xff]
    %v462 = vld [vmem:[#allocation8 + $0x1f8] sm:$0xff]
    %v463 = vld [vmem:[#allocation2] sm:$0xff]
    %v464 = vld [vmem:[#allocation3] sm:$0xff]
    loop: start=0, step=1, limit=2
    $region42: #{ocr_forward.1} parent=1 // loop_pre_header
      _
    $region43: #{ocr_forward.1} parent=1 // loop_header
      %s466 = sphi 0, %s470
      %p467 = scmp.ge.s32.totalorder %s466, 2
      %v471 = vphi %v463, %v1169
      %v472 = vphi %v464, %v1167
    $region44: #{ocr_forward.1} parent=1 // loop_header_branch
      %469 = sbr.rel (%p467) target = $region48
    $region45: #{ocr_forward.1} parent=1 // loop_body
      %s473 = smul.u32 %s466, 4
      %s474 = smul.u32 %s473, 4
      %s475 = smul.addr %s474, 8
      %s476 = scalar_lea.vmem [#allocation4], %s475
      %v477 = vld [vmem:[%s476] sm:$0xff]
      %v478 = vld [vmem:[%s476 + $0x8] sm:$0xff]
      %v479 = vld [vmem:[%s476 + $0x10] sm:$0xff]
      %v480 = vld [vmem:[%s476 + $0x18] sm:$0xff]
      %481 = vmatprep.subr.mxu0 %v460
      %482 = vmatpush1.msra.mxu0 %v459
      %483 = vmatprep.subr.mxu0 %v456
      %484 = vmatpush1.msra.mxu0 %v455
      %485 = vmatprep.subr.mxu0 %v452
      %486 = vmatpush1.msra.mxu0 %v451
      %487 = vmatprep.subr.mxu0 %v448
      %488 = vmatpush1.msra.mxu0 %v447
      %489 = vmatprep.subr.mxu0 %v444
      %490 = vmatpush1.msra.mxu0 %v443
      %491 = vmatprep.subr.mxu0 %v440
      %492 = vmatpush1.msra.mxu0 %v439
      %493 = vmatprep.subr.mxu0 %v436
      %494 = vmatpush1.msra.mxu0 %v435
      %495 = vmatprep.subr.mxu0 %v432
      %496 = vmatpush1.msra.mxu0 %v431
      %497 = vmatprep.subr.mxu0 %v428
      %498 = vmatpush1.msra.mxu0 %v427
      %499 = vmatprep.subr.mxu0 %v424
      %500 = vmatpush1.msra.mxu0 %v423
      %501 = vmatprep.subr.mxu0 %v420
      %502 = vmatpush1.msra.mxu0 %v419
      %503 = vmatprep.subr.mxu0 %v416
      %504 = vmatpush1.msra.mxu0 %v415
      %505 = vmatprep.subr.mxu0 %v412
      %506 = vmatpush1.msra.mxu0 %v411
      %507 = vmatprep.subr.mxu0 %v408
      %508 = vmatpush1.msra.mxu0 %v407
      %509 = vmatprep.subr.mxu0 %v404
      %510 = vmatpush1.msra.mxu0 %v403
      %511 = vmatprep.subr.mxu0 %v400
      %512 = vmatpush1.msra.mxu0 %v399
      %513 = vmatprep.subr.mxu0 0.0
      %514 = vmatpush2.msra.mxu0 0.0
      %515 = vmatprep.subr.mxu0 0.0
      %516 = vmatpush2.msra.mxu0 0.0
      %517 = vmatprep.subr.mxu0 0.0
      %518 = vmatpush2.msra.mxu0 0.0
      %519 = vmatprep.subr.mxu0 0.0
      %520 = vmatpush2.msra.mxu0 0.0
      %521 = vmatprep.subr.mxu0 0.0
      %522 = vmatpush2.msra.mxu0 0.0
      %523 = vmatprep.subr.mxu0 0.0
      %524 = vmatpush2.msra.mxu0 0.0
      %525 = vmatprep.subr.mxu0 0.0
      %526 = vmatpush2.msra.mxu0 0.0
      %527 = vmatprep.subr.mxu0 0.0
      %528 = vmatpush2.msra.mxu0 0.0
      %529 = vmatprep.subr.mxu0 0.0
      %530 = vmatpush2.msra.mxu0 0.0
      %531 = vmatprep.subr.mxu0 0.0
      %532 = vmatpush2.msra.mxu0 0.0
      %533 = vmatprep.subr.mxu0 0.0
      %534 = vmatpush2.msra.mxu0 0.0
      %535 = vmatprep.subr.mxu0 0.0
      %536 = vmatpush2.msra.mxu0 0.0
      %537 = vmatprep.subr.mxu0 0.0
      %538 = vmatpush2.msra.mxu0 0.0
      %539 = vmatprep.subr.mxu0 0.0
      %540 = vmatpush2.msra.mxu0 0.0
      %541 = vmatprep.subr.mxu0 0.0
      %542 = vmatpush2.msra.mxu0 0.0
      %543 = vmatprep.subr.mxu0 0.0
      %544 = vmatpush2.msra.mxu0 0.0
      %545 = vmatprep.mubr.f32.mxu0 0.0
      %546 = vmatmul.mubr.f32.gmra.mxu0 %v471
      %v547 = vpop.f32.mrf.mxu0
      %v548 = vadd.f32 0.0, %v547
      %v549 = vpop.f32.mrf.mxu0
      %v550 = vadd.f32 0.0, %v549
      %551 = vdwg.mxu0
      %552 = vmatprep.subr.mxu0 %v462
      %553 = vmatpush1.msra.mxu0 %v461
      %554 = vmatprep.subr.mxu0 %v458
      %555 = vmatpush1.msra.mxu0 %v457
      %556 = vmatprep.subr.mxu0 %v454
      %557 = vmatpush1.msra.mxu0 %v453
      %558 = vmatprep.subr.mxu0 %v450
      %559 = vmatpush1.msra.mxu0 %v449
      %560 = vmatprep.subr.mxu0 %v446
      %561 = vmatpush1.msra.mxu0 %v445
      %562 = vmatprep.subr.mxu0 %v442
      %563 = vmatpush1.msra.mxu0 %v441
      %564 = vmatprep.subr.mxu0 %v438
      %565 = vmatpush1.msra.mxu0 %v437
      %566 = vmatprep.subr.mxu0 %v434
      %567 = vmatpush1.msra.mxu0 %v433
      %568 = vmatprep.subr.mxu0 %v430
      %569 = vmatpush1.msra.mxu0 %v429
      %570 = vmatprep.subr.mxu0 %v426
      %571 = vmatpush1.msra.mxu0 %v425
      %572 = vmatprep.subr.mxu0 %v422
      %573 = vmatpush1.msra.mxu0 %v421
      %574 = vmatprep.subr.mxu0 %v418
      %575 = vmatpush1.msra.mxu0 %v417
      %576 = vmatprep.subr.mxu0 %v414
      %577 = vmatpush1.msra.mxu0 %v413
      %578 = vmatprep.subr.mxu0 %v410
      %579 = vmatpush1.msra.mxu0 %v409
      %580 = vmatprep.subr.mxu0 %v406
      %581 = vmatpush1.msra.mxu0 %v405
      %582 = vmatprep.subr.mxu0 %v402
      %583 = vmatpush1.msra.mxu0 %v401
      %584 = vmatprep.subr.mxu0 0.0
      %585 = vmatpush2.msra.mxu0 0.0
      %586 = vmatprep.subr.mxu0 0.0
      %587 = vmatpush2.msra.mxu0 0.0
      %588 = vmatprep.subr.mxu0 0.0
      %589 = vmatpush2.msra.mxu0 0.0
      %590 = vmatprep.subr.mxu0 0.0
      %591 = vmatpush2.msra.mxu0 0.0
      %592 = vmatprep.subr.mxu0 0.0
      %593 = vmatpush2.msra.mxu0 0.0
      %594 = vmatprep.subr.mxu0 0.0
      %595 = vmatpush2.msra.mxu0 0.0
      %596 = vmatprep.subr.mxu0 0.0
      %597 = vmatpush2.msra.mxu0 0.0
      %598 = vmatprep.subr.mxu0 0.0
      %599 = vmatpush2.msra.mxu0 0.0
      %600 = vmatprep.subr.mxu0 0.0
      %601 = vmatpush2.msra.mxu0 0.0
      %602 = vmatprep.subr.mxu0 0.0
      %603 = vmatpush2.msra.mxu0 0.0
      %604 = vmatprep.subr.mxu0 0.0
      %605 = vmatpush2.msra.mxu0 0.0
      %606 = vmatprep.subr.mxu0 0.0
      %607 = vmatpush2.msra.mxu0 0.0
      %608 = vmatprep.subr.mxu0 0.0
      %609 = vmatpush2.msra.mxu0 0.0
      %610 = vmatprep.subr.mxu0 0.0
      %611 = vmatpush2.msra.mxu0 0.0
      %612 = vmatprep.subr.mxu0 0.0
      %613 = vmatpush2.msra.mxu0 0.0
      %614 = vmatprep.subr.mxu0 0.0
      %615 = vmatpush2.msra.mxu0 0.0
      %616 = vmatprep.mubr.f32.mxu0 0.0
      %617 = vmatmul.mubr.f32.gmra.mxu0 %v471
      %v618 = vpop.f32.mrf.mxu0
      %v619 = vadd.f32 0.0, %v618
      %v620 = vpop.f32.mrf.mxu0
      %v621 = vadd.f32 0.0, %v620
      %622 = vdwg.mxu0
      %v623 = vadd.f32 %v477, %v548
      %v624 = vadd.f32 %v478, %v550
      %v625 = vadd.f32 %v479, %v619
      %v626 = vadd.f32 %v480, %v621
      %v627 = vmul.f32 %v623, 0.5
      %v628 = vtanh.pop %v627
      %v629 = vadd.f32 %v628, 1.0
      %v630 = vmul.f32 %v629, 0.5
      %v631 = vmul.f32 %v624, 0.5
      %v632 = vtanh.pop %v631
      %v633 = vadd.f32 %v632, 1.0
      %v634 = vmul.f32 %v633, 0.5
      %v635 = vtanh.pop %v625
      %v636 = vmul.f32 %v626, 0.5
      %v637 = vtanh.pop %v636
      %v638 = vadd.f32 %v637, 1.0
      %v639 = vmul.f32 %v638, 0.5
      %v640 = vmul.f32 %v634, %v472
      %v641 = vmul.f32 %v630, %v635
      %v642 = vadd.f32 %v640, %v641
      %v643 = vtanh.pop %v642
      %v644 = vmul.f32 %v639, %v643
      %s645 = smul.u32 %s473, 8
      %s646 = scalar_lea.vmem [#allocation5], %s645
      %647 = vst [vmem:[%s646] sm:$0xff] %v644
      %s648 = sadd.s32 %s473, 1
      %s649 = smul.u32 %s648, 4
      %s650 = smul.addr %s649, 8
      %s651 = scalar_lea.vmem [#allocation4], %s650
      %v652 = vld [vmem:[%s651] sm:$0xff]
      %v653 = vld [vmem:[%s651 + $0x8] sm:$0xff]
      %v654 = vld [vmem:[%s651 + $0x10] sm:$0xff]
      %v655 = vld [vmem:[%s651 + $0x18] sm:$0xff]
      %656 = vmatprep.subr.mxu0 %v460
      %657 = vmatpush1.msra.mxu0 %v459
      %658 = vmatprep.subr.mxu0 %v456
      %659 = vmatpush1.msra.mxu0 %v455
      %660 = vmatprep.subr.mxu0 %v452
      %661 = vmatpush1.msra.mxu0 %v451
      %662 = vmatprep.subr.mxu0 %v448
      %663 = vmatpush1.msra.mxu0 %v447
      %664 = vmatprep.subr.mxu0 %v444
      %665 = vmatpush1.msra.mxu0 %v443
      %666 = vmatprep.subr.mxu0 %v440
      %667 = vmatpush1.msra.mxu0 %v439
      %668 = vmatprep.subr.mxu0 %v436
      %669 = vmatpush1.msra.mxu0 %v435
      %670 = vmatprep.subr.mxu0 %v432
      %671 = vmatpush1.msra.mxu0 %v431
      %672 = vmatprep.subr.mxu0 %v428
      %673 = vmatpush1.msra.mxu0 %v427
      %674 = vmatprep.subr.mxu0 %v424
      %675 = vmatpush1.msra.mxu0 %v423
      %676 = vmatprep.subr.mxu0 %v420
      %677 = vmatpush1.msra.mxu0 %v419
      %678 = vmatprep.subr.mxu0 %v416
      %679 = vmatpush1.msra.mxu0 %v415
      %680 = vmatprep.subr.mxu0 %v412
      %681 = vmatpush1.msra.mxu0 %v411
      %682 = vmatprep.subr.mxu0 %v408
      %683 = vmatpush1.msra.mxu0 %v407
      %684 = vmatprep.subr.mxu0 %v404
      %685 = vmatpush1.msra.mxu0 %v403
      %686 = vmatprep.subr.mxu0 %v400
      %687 = vmatpush1.msra.mxu0 %v399
      %688 = vmatprep.subr.mxu0 0.0
      %689 = vmatpush2.msra.mxu0 0.0
      %690 = vmatprep.subr.mxu0 0.0
      %691 = vmatpush2.msra.mxu0 0.0
      %692 = vmatprep.subr.mxu0 0.0
      %693 = vmatpush2.msra.mxu0 0.0
      %694 = vmatprep.subr.mxu0 0.0
      %695 = vmatpush2.msra.mxu0 0.0
      %696 = vmatprep.subr.mxu0 0.0
      %697 = vmatpush2.msra.mxu0 0.0
      %698 = vmatprep.subr.mxu0 0.0
      %699 = vmatpush2.msra.mxu0 0.0
      %700 = vmatprep.subr.mxu0 0.0
      %701 = vmatpush2.msra.mxu0 0.0
      %702 = vmatprep.subr.mxu0 0.0
      %703 = vmatpush2.msra.mxu0 0.0
      %704 = vmatprep.subr.mxu0 0.0
      %705 = vmatpush2.msra.mxu0 0.0
      %706 = vmatprep.subr.mxu0 0.0
      %707 = vmatpush2.msra.mxu0 0.0
      %708 = vmatprep.subr.mxu0 0.0
      %709 = vmatpush2.msra.mxu0 0.0
      %710 = vmatprep.subr.mxu0 0.0
      %711 = vmatpush2.msra.mxu0 0.0
      %712 = vmatprep.subr.mxu0 0.0
      %713 = vmatpush2.msra.mxu0 0.0
      %714 = vmatprep.subr.mxu0 0.0
      %715 = vmatpush2.msra.mxu0 0.0
      %716 = vmatprep.subr.mxu0 0.0
      %717 = vmatpush2.msra.mxu0 0.0
      %718 = vmatprep.subr.mxu0 0.0
      %719 = vmatpush2.msra.mxu0 0.0
      %720 = vmatprep.mubr.f32.mxu0 0.0
      %721 = vmatmul.mubr.f32.gmra.mxu0 %v644
      %v722 = vpop.f32.mrf.mxu0
      %v723 = vadd.f32 0.0, %v722
      %v724 = vpop.f32.mrf.mxu0
      %v725 = vadd.f32 0.0, %v724
      %726 = vdwg.mxu0
      %727 = vmatprep.subr.mxu0 %v462
      %728 = vmatpush1.msra.mxu0 %v461
      %729 = vmatprep.subr.mxu0 %v458
      %730 = vmatpush1.msra.mxu0 %v457
      %731 = vmatprep.subr.mxu0 %v454
      %732 = vmatpush1.msra.mxu0 %v453
      %733 = vmatprep.subr.mxu0 %v450
      %734 = vmatpush1.msra.mxu0 %v449
      %735 = vmatprep.subr.mxu0 %v446
      %736 = vmatpush1.msra.mxu0 %v445
      %737 = vmatprep.subr.mxu0 %v442
      %738 = vmatpush1.msra.mxu0 %v441
      %739 = vmatprep.subr.mxu0 %v438
      %740 = vmatpush1.msra.mxu0 %v437
      %741 = vmatprep.subr.mxu0 %v434
      %742 = vmatpush1.msra.mxu0 %v433
      %743 = vmatprep.subr.mxu0 %v430
      %744 = vmatpush1.msra.mxu0 %v429
      %745 = vmatprep.subr.mxu0 %v426
      %746 = vmatpush1.msra.mxu0 %v425
      %747 = vmatprep.subr.mxu0 %v422
      %748 = vmatpush1.msra.mxu0 %v421
      %749 = vmatprep.subr.mxu0 %v418
      %750 = vmatpush1.msra.mxu0 %v417
      %751 = vmatprep.subr.mxu0 %v414
      %752 = vmatpush1.msra.mxu0 %v413
      %753 = vmatprep.subr.mxu0 %v410
      %754 = vmatpush1.msra.mxu0 %v409
      %755 = vmatprep.subr.mxu0 %v406
      %756 = vmatpush1.msra.mxu0 %v405
      %757 = vmatprep.subr.mxu0 %v402
      %758 = vmatpush1.msra.mxu0 %v401
      %759 = vmatprep.subr.mxu0 0.0
      %760 = vmatpush2.msra.mxu0 0.0
      %761 = vmatprep.subr.mxu0 0.0
      %762 = vmatpush2.msra.mxu0 0.0
      %763 = vmatprep.subr.mxu0 0.0
      %764 = vmatpush2.msra.mxu0 0.0
      %765 = vmatprep.subr.mxu0 0.0
      %766 = vmatpush2.msra.mxu0 0.0
      %767 = vmatprep.subr.mxu0 0.0
      %768 = vmatpush2.msra.mxu0 0.0
      %769 = vmatprep.subr.mxu0 0.0
      %770 = vmatpush2.msra.mxu0 0.0
      %771 = vmatprep.subr.mxu0 0.0
      %772 = vmatpush2.msra.mxu0 0.0
      %773 = vmatprep.subr.mxu0 0.0
      %774 = vmatpush2.msra.mxu0 0.0
      %775 = vmatprep.subr.mxu0 0.0
      %776 = vmatpush2.msra.mxu0 0.0
      %777 = vmatprep.subr.mxu0 0.0
      %778 = vmatpush2.msra.mxu0 0.0
      %779 = vmatprep.subr.mxu0 0.0
      %780 = vmatpush2.msra.mxu0 0.0
      %781 = vmatprep.subr.mxu0 0.0
      %782 = vmatpush2.msra.mxu0 0.0
      %783 = vmatprep.subr.mxu0 0.0
      %784 = vmatpush2.msra.mxu0 0.0
      %785 = vmatprep.subr.mxu0 0.0
      %786 = vmatpush2.msra.mxu0 0.0
      %787 = vmatprep.subr.mxu0 0.0
      %788 = vmatpush2.msra.mxu0 0.0
      %789 = vmatprep.subr.mxu0 0.0
      %790 = vmatpush2.msra.mxu0 0.0
      %791 = vmatprep.mubr.f32.mxu0 0.0
      %792 = vmatmul.mubr.f32.gmra.mxu0 %v644
      %v793 = vpop.f32.mrf.mxu0
      %v794 = vadd.f32 0.0, %v793
      %v795 = vpop.f32.mrf.mxu0
      %v796 = vadd.f32 0.0, %v795
      %797 = vdwg.mxu0
      %v798 = vadd.f32 %v652, %v723
      %v799 = vadd.f32 %v653, %v725
      %v800 = vadd.f32 %v654, %v794
      %v801 = vadd.f32 %v655, %v796
      %v802 = vmul.f32 %v798, 0.5
      %v803 = vtanh.pop %v802
      %v804 = vadd.f32 %v803, 1.0
      %v805 = vmul.f32 %v804, 0.5
      %v806 = vmul.f32 %v799, 0.5
      %v807 = vtanh.pop %v806
      %v808 = vadd.f32 %v807, 1.0
      %v809 = vmul.f32 %v808, 0.5
      %v810 = vtanh.pop %v800
      %v811 = vmul.f32 %v801, 0.5
      %v812 = vtanh.pop %v811
      %v813 = vadd.f32 %v812, 1.0
      %v814 = vmul.f32 %v813, 0.5
      %v815 = vmul.f32 %v809, %v642
      %v816 = vmul.f32 %v805, %v810
      %v817 = vadd.f32 %v815, %v816
      %v818 = vtanh.pop %v817
      %v819 = vmul.f32 %v814, %v818
      %s820 = smul.u32 %s648, 8
      %s821 = scalar_lea.vmem [#allocation5], %s820
      %822 = vst [vmem:[%s821] sm:$0xff] %v819
      %s823 = sadd.s32 %s473, 2
      %s824 = smul.u32 %s823, 4
      %s825 = smul.addr %s824, 8
      %s826 = scalar_lea.vmem [#allocation4], %s825
      %v827 = vld [vmem:[%s826] sm:$0xff]
      %v828 = vld [vmem:[%s826 + $0x8] sm:$0xff]
      %v829 = vld [vmem:[%s826 + $0x10] sm:$0xff]
      %v830 = vld [vmem:[%s826 + $0x18] sm:$0xff]
      %831 = vmatprep.subr.mxu0 %v460
      %832 = vmatpush1.msra.mxu0 %v459
      %833 = vmatprep.subr.mxu0 %v456
      %834 = vmatpush1.msra.mxu0 %v455
      %835 = vmatprep.subr.mxu0 %v452
      %836 = vmatpush1.msra.mxu0 %v451
      %837 = vmatprep.subr.mxu0 %v448
      %838 = vmatpush1.msra.mxu0 %v447
      %839 = vmatprep.subr.mxu0 %v444
      %840 = vmatpush1.msra.mxu0 %v443
      %841 = vmatprep.subr.mxu0 %v440
      %842 = vmatpush1.msra.mxu0 %v439
      %843 = vmatprep.subr.mxu0 %v436
      %844 = vmatpush1.msra.mxu0 %v435
      %845 = vmatprep.subr.mxu0 %v432
      %846 = vmatpush1.msra.mxu0 %v431
      %847 = vmatprep.subr.mxu0 %v428
      %848 = vmatpush1.msra.mxu0 %v427
      %849 = vmatprep.subr.mxu0 %v424
      %850 = vmatpush1.msra.mxu0 %v423
      %851 = vmatprep.subr.mxu0 %v420
      %852 = vmatpush1.msra.mxu0 %v419
      %853 = vmatprep.subr.mxu0 %v416
      %854 = vmatpush1.msra.mxu0 %v415
      %855 = vmatprep.subr.mxu0 %v412
      %856 = vmatpush1.msra.mxu0 %v411
      %857 = vmatprep.subr.mxu0 %v408
      %858 = vmatpush1.msra.mxu0 %v407
      %859 = vmatprep.subr.mxu0 %v404
      %860 = vmatpush1.msra.mxu0 %v403
      %861 = vmatprep.subr.mxu0 %v400
      %862 = vmatpush1.msra.mxu0 %v399
      %863 = vmatprep.subr.mxu0 0.0
      %864 = vmatpush2.msra.mxu0 0.0
      %865 = vmatprep.subr.mxu0 0.0
      %866 = vmatpush2.msra.mxu0 0.0
      %867 = vmatprep.subr.mxu0 0.0
      %868 = vmatpush2.msra.mxu0 0.0
      %869 = vmatprep.subr.mxu0 0.0
      %870 = vmatpush2.msra.mxu0 0.0
      %871 = vmatprep.subr.mxu0 0.0
      %872 = vmatpush2.msra.mxu0 0.0
      %873 = vmatprep.subr.mxu0 0.0
      %874 = vmatpush2.msra.mxu0 0.0
      %875 = vmatprep.subr.mxu0 0.0
      %876 = vmatpush2.msra.mxu0 0.0
      %877 = vmatprep.subr.mxu0 0.0
      %878 = vmatpush2.msra.mxu0 0.0
      %879 = vmatprep.subr.mxu0 0.0
      %880 = vmatpush2.msra.mxu0 0.0
      %881 = vmatprep.subr.mxu0 0.0
      %882 = vmatpush2.msra.mxu0 0.0
      %883 = vmatprep.subr.mxu0 0.0
      %884 = vmatpush2.msra.mxu0 0.0
      %885 = vmatprep.subr.mxu0 0.0
      %886 = vmatpush2.msra.mxu0 0.0
      %887 = vmatprep.subr.mxu0 0.0
      %888 = vmatpush2.msra.mxu0 0.0
      %889 = vmatprep.subr.mxu0 0.0
      %890 = vmatpush2.msra.mxu0 0.0
      %891 = vmatprep.subr.mxu0 0.0
      %892 = vmatpush2.msra.mxu0 0.0
      %893 = vmatprep.subr.mxu0 0.0
      %894 = vmatpush2.msra.mxu0 0.0
      %895 = vmatprep.mubr.f32.mxu0 0.0
      %896 = vmatmul.mubr.f32.gmra.mxu0 %v819
      %v897 = vpop.f32.mrf.mxu0
      %v898 = vadd.f32 0.0, %v897
      %v899 = vpop.f32.mrf.mxu0
      %v900 = vadd.f32 0.0, %v899
      %901 = vdwg.mxu0
      %902 = vmatprep.subr.mxu0 %v462
      %903 = vmatpush1.msra.mxu0 %v461
      %904 = vmatprep.subr.mxu0 %v458
      %905 = vmatpush1.msra.mxu0 %v457
      %906 = vmatprep.subr.mxu0 %v454
      %907 = vmatpush1.msra.mxu0 %v453
      %908 = vmatprep.subr.mxu0 %v450
      %909 = vmatpush1.msra.mxu0 %v449
      %910 = vmatprep.subr.mxu0 %v446
      %911 = vmatpush1.msra.mxu0 %v445
      %912 = vmatprep.subr.mxu0 %v442
      %913 = vmatpush1.msra.mxu0 %v441
      %914 = vmatprep.subr.mxu0 %v438
      %915 = vmatpush1.msra.mxu0 %v437
      %916 = vmatprep.subr.mxu0 %v434
      %917 = vmatpush1.msra.mxu0 %v433
      %918 = vmatprep.subr.mxu0 %v430
      %919 = vmatpush1.msra.mxu0 %v429
      %920 = vmatprep.subr.mxu0 %v426
      %921 = vmatpush1.msra.mxu0 %v425
      %922 = vmatprep.subr.mxu0 %v422
      %923 = vmatpush1.msra.mxu0 %v421
      %924 = vmatprep.subr.mxu0 %v418
      %925 = vmatpush1.msra.mxu0 %v417
      %926 = vmatprep.subr.mxu0 %v414
      %927 = vmatpush1.msra.mxu0 %v413
      %928 = vmatprep.subr.mxu0 %v410
      %929 = vmatpush1.msra.mxu0 %v409
      %930 = vmatprep.subr.mxu0 %v406
      %931 = vmatpush1.msra.mxu0 %v405
      %932 = vmatprep.subr.mxu0 %v402
      %933 = vmatpush1.msra.mxu0 %v401
      %934 = vmatprep.subr.mxu0 0.0
      %935 = vmatpush2.msra.mxu0 0.0
      %936 = vmatprep.subr.mxu0 0.0
      %937 = vmatpush2.msra.mxu0 0.0
      %938 = vmatprep.subr.mxu0 0.0
      %939 = vmatpush2.msra.mxu0 0.0
      %940 = vmatprep.subr.mxu0 0.0
      %941 = vmatpush2.msra.mxu0 0.0
      %942 = vmatprep.subr.mxu0 0.0
      %943 = vmatpush2.msra.mxu0 0.0
      %944 = vmatprep.subr.mxu0 0.0
      %945 = vmatpush2.msra.mxu0 0.0
      %946 = vmatprep.subr.mxu0 0.0
      %947 = vmatpush2.msra.mxu0 0.0
      %948 = vmatprep.subr.mxu0 0.0
      %949 = vmatpush2.msra.mxu0 0.0
      %950 = vmatprep.subr.mxu0 0.0
      %951 = vmatpush2.msra.mxu0 0.0
      %952 = vmatprep.subr.mxu0 0.0
      %953 = vmatpush2.msra.mxu0 0.0
      %954 = vmatprep.subr.mxu0 0.0
      %955 = vmatpush2.msra.mxu0 0.0
      %956 = vmatprep.subr.mxu0 0.0
      %957 = vmatpush2.msra.mxu0 0.0
      %958 = vmatprep.subr.mxu0 0.0
      %959 = vmatpush2.msra.mxu0 0.0
      %960 = vmatprep.subr.mxu0 0.0
      %961 = vmatpush2.msra.mxu0 0.0
      %962 = vmatprep.subr.mxu0 0.0
      %963 = vmatpush2.msra.mxu0 0.0
      %964 = vmatprep.subr.mxu0 0.0
      %965 = vmatpush2.msra.mxu0 0.0
      %966 = vmatprep.mubr.f32.mxu0 0.0
      %967 = vmatmul.mubr.f32.gmra.mxu0 %v819
      %v968 = vpop.f32.mrf.mxu0
      %v969 = vadd.f32 0.0, %v968
      %v970 = vpop.f32.mrf.mxu0
      %v971 = vadd.f32 0.0, %v970
      %972 = vdwg.mxu0
      %v973 = vadd.f32 %v827, %v898
      %v974 = vadd.f32 %v828, %v900
      %v975 = vadd.f32 %v829, %v969
      %v976 = vadd.f32 %v830, %v971
      %v977 = vmul.f32 %v973, 0.5
      %v978 = vtanh.pop %v977
      %v979 = vadd.f32 %v978, 1.0
      %v980 = vmul.f32 %v979, 0.5
      %v981 = vmul.f32 %v974, 0.5
      %v982 = vtanh.pop %v981
      %v983 = vadd.f32 %v982, 1.0
      %v984 = vmul.f32 %v983, 0.5
      %v985 = vtanh.pop %v975
      %v986 = vmul.f32 %v976, 0.5
      %v987 = vtanh.pop %v986
      %v988 = vadd.f32 %v987, 1.0
      %v989 = vmul.f32 %v988, 0.5
      %v990 = vmul.f32 %v984, %v817
      %v991 = vmul.f32 %v980, %v985
      %v992 = vadd.f32 %v990, %v991
      %v993 = vtanh.pop %v992
      %v994 = vmul.f32 %v989, %v993
      %s995 = smul.u32 %s823, 8
      %s996 = scalar_lea.vmem [#allocation5], %s995
      %997 = vst [vmem:[%s996] sm:$0xff] %v994
      %s998 = sadd.s32 %s473, 3
      %s999 = smul.u32 %s998, 4
      %s1000 = smul.addr %s999, 8
      %s1001 = scalar_lea.vmem [#allocation4], %s1000
      %v1002 = vld [vmem:[%s1001] sm:$0xff]
      %v1003 = vld [vmem:[%s1001 + $0x8] sm:$0xff]
      %v1004 = vld [vmem:[%s1001 + $0x10] sm:$0xff]
      %v1005 = vld [vmem:[%s1001 + $0x18] sm:$0xff]
      %1006 = vmatprep.subr.mxu0 %v460
      %1007 = vmatpush1.msra.mxu0 %v459
      %1008 = vmatprep.subr.mxu0 %v456
      %1009 = vmatpush1.msra.mxu0 %v455
      %1010 = vmatprep.subr.mxu0 %v452
      %1011 = vmatpush1.msra.mxu0 %v451
      %1012 = vmatprep.subr.mxu0 %v448
      %1013 = vmatpush1.msra.mxu0 %v447
      %1014 = vmatprep.subr.mxu0 %v444
      %1015 = vmatpush1.msra.mxu0 %v443
      %1016 = vmatprep.subr.mxu0 %v440
      %1017 = vmatpush1.msra.mxu0 %v439
      %1018 = vmatprep.subr.mxu0 %v436
      %1019 = vmatpush1.msra.mxu0 %v435
      %1020 = vmatprep.subr.mxu0 %v432
      %1021 = vmatpush1.msra.mxu0 %v431
      %1022 = vmatprep.subr.mxu0 %v428
      %1023 = vmatpush1.msra.mxu0 %v427
      %1024 = vmatprep.subr.mxu0 %v424
      %1025 = vmatpush1.msra.mxu0 %v423
      %1026 = vmatprep.subr.mxu0 %v420
      %1027 = vmatpush1.msra.mxu0 %v419
      %1028 = vmatprep.subr.mxu0 %v416
      %1029 = vmatpush1.msra.mxu0 %v415
      %1030 = vmatprep.subr.mxu0 %v412
      %1031 = vmatpush1.msra.mxu0 %v411
      %1032 = vmatprep.subr.mxu0 %v408
      %1033 = vmatpush1.msra.mxu0 %v407
      %1034 = vmatprep.subr.mxu0 %v404
      %1035 = vmatpush1.msra.mxu0 %v403
      %1036 = vmatprep.subr.mxu0 %v400
      %1037 = vmatpush1.msra.mxu0 %v399
      %1038 = vmatprep.subr.mxu0 0.0
      %1039 = vmatpush2.msra.mxu0 0.0
      %1040 = vmatprep.subr.mxu0 0.0
      %1041 = vmatpush2.msra.mxu0 0.0
      %1042 = vmatprep.subr.mxu0 0.0
      %1043 = vmatpush2.msra.mxu0 0.0
      %1044 = vmatprep.subr.mxu0 0.0
      %1045 = vmatpush2.msra.mxu0 0.0
      %1046 = vmatprep.subr.mxu0 0.0
      %1047 = vmatpush2.msra.mxu0 0.0
      %1048 = vmatprep.subr.mxu0 0.0
      %1049 = vmatpush2.msra.mxu0 0.0
      %1050 = vmatprep.subr.mxu0 0.0
      %1051 = vmatpush2.msra.mxu0 0.0
      %1052 = vmatprep.subr.mxu0 0.0
      %1053 = vmatpush2.msra.mxu0 0.0
      %1054 = vmatprep.subr.mxu0 0.0
      %1055 = vmatpush2.msra.mxu0 0.0
      %1056 = vmatprep.subr.mxu0 0.0
      %1057 = vmatpush2.msra.mxu0 0.0
      %1058 = vmatprep.subr.mxu0 0.0
      %1059 = vmatpush2.msra.mxu0 0.0
      %1060 = vmatprep.subr.mxu0 0.0
      %1061 = vmatpush2.msra.mxu0 0.0
      %1062 = vmatprep.subr.mxu0 0.0
      %1063 = vmatpush2.msra.mxu0 0.0
      %1064 = vmatprep.subr.mxu0 0.0
      %1065 = vmatpush2.msra.mxu0 0.0
      %1066 = vmatprep.subr.mxu0 0.0
      %1067 = vmatpush2.msra.mxu0 0.0
      %1068 = vmatprep.subr.mxu0 0.0
      %1069 = vmatpush2.msra.mxu0 0.0
      %1070 = vmatprep.mubr.f32.mxu0 0.0
      %1071 = vmatmul.mubr.f32.gmra.mxu0 %v994
      %v1072 = vpop.f32.mrf.mxu0
      %v1073 = vadd.f32 0.0, %v1072
      %v1074 = vpop.f32.mrf.mxu0
      %v1075 = vadd.f32 0.0, %v1074
      %1076 = vdwg.mxu0
      %1077 = vmatprep.subr.mxu0 %v462
      %1078 = vmatpush1.msra.mxu0 %v461
      %1079 = vmatprep.subr.mxu0 %v458
      %1080 = vmatpush1.msra.mxu0 %v457
      %1081 = vmatprep.subr.mxu0 %v454
      %1082 = vmatpush1.msra.mxu0 %v453
      %1083 = vmatprep.subr.mxu0 %v450
      %1084 = vmatpush1.msra.mxu0 %v449
      %1085 = vmatprep.subr.mxu0 %v446
      %1086 = vmatpush1.msra.mxu0 %v445
      %1087 = vmatprep.subr.mxu0 %v442
      %1088 = vmatpush1.msra.mxu0 %v441
      %1089 = vmatprep.subr.mxu0 %v438
      %1090 = vmatpush1.msra.mxu0 %v437
      %1091 = vmatprep.subr.mxu0 %v434
      %1092 = vmatpush1.msra.mxu0 %v433
      %1093 = vmatprep.subr.mxu0 %v430
      %1094 = vmatpush1.msra.mxu0 %v429
      %1095 = vmatprep.subr.mxu0 %v426
      %1096 = vmatpush1.msra.mxu0 %v425
      %1097 = vmatprep.subr.mxu0 %v422
      %1098 = vmatpush1.msra.mxu0 %v421
      %1099 = vmatprep.subr.mxu0 %v418
      %1100 = vmatpush1.msra.mxu0 %v417
      %1101 = vmatprep.subr.mxu0 %v414
      %1102 = vmatpush1.msra.mxu0 %v413
      %1103 = vmatprep.subr.mxu0 %v410
      %1104 = vmatpush1.msra.mxu0 %v409
      %1105 = vmatprep.subr.mxu0 %v406
      %1106 = vmatpush1.msra.mxu0 %v405
      %1107 = vmatprep.subr.mxu0 %v402
      %1108 = vmatpush1.msra.mxu0 %v401
      %1109 = vmatprep.subr.mxu0 0.0
      %1110 = vmatpush2.msra.mxu0 0.0
      %1111 = vmatprep.subr.mxu0 0.0
      %1112 = vmatpush2.msra.mxu0 0.0
      %1113 = vmatprep.subr.mxu0 0.0
      %1114 = vmatpush2.msra.mxu0 0.0
      %1115 = vmatprep.subr.mxu0 0.0
      %1116 = vmatpush2.msra.mxu0 0.0
      %1117 = vmatprep.subr.mxu0 0.0
      %1118 = vmatpush2.msra.mxu0 0.0
      %1119 = vmatprep.subr.mxu0 0.0
      %1120 = vmatpush2.msra.mxu0 0.0
      %1121 = vmatprep.subr.mxu0 0.0
      %1122 = vmatpush2.msra.mxu0 0.0
      %1123 = vmatprep.subr.mxu0 0.0
      %1124 = vmatpush2.msra.mxu0 0.0
      %1125 = vmatprep.subr.mxu0 0.0
      %1126 = vmatpush2.msra.mxu0 0.0
      %1127 = vmatprep.subr.mxu0 0.0
      %1128 = vmatpush2.msra.mxu0 0.0
      %1129 = vmatprep.subr.mxu0 0.0
      %1130 = vmatpush2.msra.mxu0 0.0
      %1131 = vmatprep.subr.mxu0 0.0
      %1132 = vmatpush2.msra.mxu0 0.0
      %1133 = vmatprep.subr.mxu0 0.0
      %1134 = vmatpush2.msra.mxu0 0.0
      %1135 = vmatprep.subr.mxu0 0.0
      %1136 = vmatpush2.msra.mxu0 0.0
      %1137 = vmatprep.subr.mxu0 0.0
      %1138 = vmatpush2.msra.mxu0 0.0
      %1139 = vmatprep.subr.mxu0 0.0
      %1140 = vmatpush2.msra.mxu0 0.0
      %1141 = vmatprep.mubr.f32.mxu0 0.0
      %1142 = vmatmul.mubr.f32.gmra.mxu0 %v994
      %v1143 = vpop.f32.mrf.mxu0
      %v1144 = vadd.f32 0.0, %v1143
      %v1145 = vpop.f32.mrf.mxu0
      %v1146 = vadd.f32 0.0, %v1145
      %1147 = vdwg.mxu0
      %v1148 = vadd.f32 %v1002, %v1073
      %v1149 = vadd.f32 %v1003, %v1075
      %v1150 = vadd.f32 %v1004, %v1144
      %v1151 = vadd.f32 %v1005, %v1146
      %v1152 = vmul.f32 %v1148, 0.5
      %v1153 = vtanh.pop %v1152
      %v1154 = vadd.f32 %v1153, 1.0
      %v1155 = vmul.f32 %v1154, 0.5
      %v1156 = vmul.f32 %v1149, 0.5
      %v1157 = vtanh.pop %v1156
      %v1158 = vadd.f32 %v1157, 1.0
      %v1159 = vmul.f32 %v1158, 0.5
      %v1160 = vtanh.pop %v1150
      %v1161 = vmul.f32 %v1151, 0.5
      %v1162 = vtanh.pop %v1161
      %v1163 = vadd.f32 %v1162, 1.0
      %v1164 = vmul.f32 %v1163, 0.5
      %v1165 = vmul.f32 %v1159, %v992
      %v1166 = vmul.f32 %v1155, %v1160
      %v1167 = vadd.f32 %v1165, %v1166
      %v1168 = vtanh.pop %v1167
      %v1169 = vmul.f32 %v1164, %v1168
      %s1170 = smul.u32 %s998, 8
      %s1171 = scalar_lea.vmem [#allocation5], %s1170
      %1172 = vst [vmem:[%s1171] sm:$0xff] %v1169
    $region46: #{ocr_forward.1} parent=1 // loop_footer
      %s470 = sadd.s32 1, %s466
    $region47: #{ocr_forward.1} parent=1 // loop_footer_branch
      %465 = sbr.rel target = $region43
    $region48: #{ocr_forward.1} parent=1 // loop_exit
      _
    %1173 = vst [vmem:[#allocation2] sm:$0xff] %v471
    %1174 = vst [vmem:[#allocation3] sm:$0xff] %v472
    %v1175 = vld [vmem:[#allocation5] sm:$0xff]
    %v1176 = vld [vmem:[#allocation5 + $0x8] sm:$0xff]
    %v1177 = vld [vmem:[#allocation5 + $0x10] sm:$0xff]
    %v1178 = vld [vmem:[#allocation5 + $0x18] sm:$0xff]
    %v1179 = vld [vmem:[#allocation5 + $0x20] sm:$0xff]
    %v1180 = vld [vmem:[#allocation5 + $0x28] sm:$0xff]
    %v1181 = vld [vmem:[#allocation5 + $0x30] sm:$0xff]
    %v1182 = vld [vmem:[#allocation5 + $0x38] sm:$0xff]
    %v1183 = vld [vmem:[#allocation10] sm:$0xff]
    %v1184 = vld [vmem:[#allocation10 + $0x8] sm:$0xff]
    %v1185 = vld [vmem:[#allocation10 + $0x10] sm:$0xff]
    %v1186 = vld [vmem:[#allocation10 + $0x18] sm:$0xff]
    %v1187 = vld [vmem:[#allocation10 + $0x20] sm:$0xff]
    %v1188 = vld [vmem:[#allocation10 + $0x28] sm:$0xff]
    %v1189 = vld [vmem:[#allocation10 + $0x30] sm:$0xff]
    %v1190 = vld [vmem:[#allocation10 + $0x38] sm:$0xff]
    %v1191 = vld [vmem:[#allocation10 + $0x40] sm:$0xff]
    %v1192 = vld [vmem:[#allocation10 + $0x48] sm:$0xff]
    %v1193 = vld [vmem:[#allocation10 + $0x50] sm:$0xff]
    %v1194 = vld [vmem:[#allocation10 + $0x58] sm:$0xff]
    %v1195 = vld [vmem:[#allocation10 + $0x60] sm:$0xff]
    %v1196 = vld [vmem:[#allocation10 + $0x68] sm:$0xff]
    %v1197 = vld [vmem:[#allocation10 + $0x70] sm:$0xff]
    %v1198 = vld [vmem:[#allocation10 + $0x78] sm:$0xff]
    %v1199 = vld [vmem:[%s5] sm:$0x1]
    %v1201 = vlaneseq
    %v1202 = vshrl.u32 %v1201, 7
    %v1203 = vsub.s32 0, %v1202
    %v1204 = vrot.slane %v1199, %v1203
    %1206 = vmatprep.subr.mxu0 0.0
    %1207 = vmatpush1.msra.mxu0 %v1198
    %1208 = vmatprep.subr.mxu0 0.0
    %1209 = vmatpush1.msra.mxu0 %v1197
    %1210 = vmatprep.subr.mxu0 0.0
    %1211 = vmatpush1.msra.mxu0 %v1196
    %1212 = vmatprep.subr.mxu0 0.0
    %1213 = vmatpush1.msra.mxu0 %v1195
    %1214 = vmatprep.subr.mxu0 0.0
    %1215 = vmatpush1.msra.mxu0 %v1194
    %1216 = vmatprep.subr.mxu0 0.0
    %1217 = vmatpush1.msra.mxu0 %v1193
    %1218 = vmatprep.subr.mxu0 0.0
    %1219 = vmatpush1.msra.mxu0 %v1192
    %1220 = vmatprep.subr.mxu0 0.0
    %1221 = vmatpush1.msra.mxu0 %v1191
    %1222 = vmatprep.subr.mxu0 0.0
    %1223 = vmatpush1.msra.mxu0 %v1190
    %1224 = vmatprep.subr.mxu0 0.0
    %1225 = vmatpush1.msra.mxu0 %v1189
    %1226 = vmatprep.subr.mxu0 0.0
    %1227 = vmatpush1.msra.mxu0 %v1188
    %1228 = vmatprep.subr.mxu0 0.0
    %1229 = vmatpush1.msra.mxu0 %v1187
    %1230 = vmatprep.subr.mxu0 0.0
    %1231 = vmatpush1.msra.mxu0 %v1186
    %1232 = vmatprep.subr.mxu0 0.0
    %1233 = vmatpush1.msra.mxu0 %v1185
    %1234 = vmatprep.subr.mxu0 0.0
    %1235 = vmatpush1.msra.mxu0 %v1184
    %1236 = vmatprep.subr.mxu0 0.0
    %1237 = vmatpush1.msra.mxu0 %v1183
    %1238 = vmatprep.subr.mxu0 0.0
    %1239 = vmatpush2.msra.mxu0 0.0
    %1240 = vmatprep.subr.mxu0 0.0
    %1241 = vmatpush2.msra.mxu0 0.0
    %1242 = vmatprep.subr.mxu0 0.0
    %1243 = vmatpush2.msra.mxu0 0.0
    %1244 = vmatprep.subr.mxu0 0.0
    %1245 = vmatpush2.msra.mxu0 0.0
    %1246 = vmatprep.subr.mxu0 0.0
    %1247 = vmatpush2.msra.mxu0 0.0
    %1248 = vmatprep.subr.mxu0 0.0
    %1249 = vmatpush2.msra.mxu0 0.0
    %1250 = vmatprep.subr.mxu0 0.0
    %1251 = vmatpush2.msra.mxu0 0.0
    %1252 = vmatprep.subr.mxu0 0.0
    %1253 = vmatpush2.msra.mxu0 0.0
    %1254 = vmatprep.subr.mxu0 0.0
    %1255 = vmatpush2.msra.mxu0 0.0
    %1256 = vmatprep.subr.mxu0 0.0
    %1257 = vmatpush2.msra.mxu0 0.0
    %1258 = vmatprep.subr.mxu0 0.0
    %1259 = vmatpush2.msra.mxu0 0.0
    %1260 = vmatprep.subr.mxu0 0.0
    %1261 = vmatpush2.msra.mxu0 0.0
    %1262 = vmatprep.subr.mxu0 0.0
    %1263 = vmatpush2.msra.mxu0 0.0
    %1264 = vmatprep.subr.mxu0 0.0
    %1265 = vmatpush2.msra.mxu0 0.0
    %1266 = vmatprep.subr.mxu0 0.0
    %1267 = vmatpush2.msra.mxu0 0.0
    %1268 = vmatprep.subr.mxu0 0.0
    %1269 = vmatpush2.msra.mxu0 0.0
    %1270 = vmatprep.mubr.f32.mxu0 0.0
    %1271 = vmatmul.mubr.f32.gmra.mxu0 %v1175
    %v1272 = vpop.f32.mrf.mxu0
    %v1273 = vadd.f32 %v1204, %v1272
    %v1274 = vpop.f32.mrf.mxu0
    %1275 = vmatprep.mubr.f32.mxu0 0.0
    %1276 = vmatmul.mubr.f32.gmra.mxu0 %v1176
    %v1277 = vpop.f32.mrf.mxu0
    %v1278 = vadd.f32 %v1204, %v1277
    %v1279 = vpop.f32.mrf.mxu0
    %1280 = vmatprep.mubr.f32.mxu0 0.0
    %1281 = vmatmul.mubr.f32.gmra.mxu0 %v1177
    %v1282 = vpop.f32.mrf.mxu0
    %v1283 = vadd.f32 %v1204, %v1282
    %v1284 = vpop.f32.mrf.mxu0
    %1285 = vmatprep.mubr.f32.mxu0 0.0
    %1286 = vmatmul.mubr.f32.gmra.mxu0 %v1178
    %v1287 = vpop.f32.mrf.mxu0
    %v1288 = vadd.f32 %v1204, %v1287
    %v1289 = vpop.f32.mrf.mxu0
    %1290 = vmatprep.mubr.f32.mxu0 0.0
    %1291 = vmatmul.mubr.f32.gmra.mxu0 %v1179
    %v1292 = vpop.f32.mrf.mxu0
    %v1293 = vadd.f32 %v1204, %v1292
    %v1294 = vpop.f32.mrf.mxu0
    %1295 = vmatprep.mubr.f32.mxu0 0.0
    %1296 = vmatmul.mubr.f32.gmra.mxu0 %v1180
    %v1297 = vpop.f32.mrf.mxu0
    %v1298 = vadd.f32 %v1204, %v1297
    %v1299 = vpop.f32.mrf.mxu0
    %1300 = vmatprep.mubr.f32.mxu0 0.0
    %1301 = vmatmul.mubr.f32.gmra.mxu0 %v1181
    %v1302 = vpop.f32.mrf.mxu0
    %v1303 = vadd.f32 %v1204, %v1302
    %v1304 = vpop.f32.mrf.mxu0
    %1305 = vmatprep.mubr.f32.mxu0 0.0
    %1306 = vmatmul.mubr.f32.gmra.mxu0 %v1182
    %v1307 = vpop.f32.mrf.mxu0
    %v1308 = vadd.f32 %v1204, %v1307
    %v1309 = vpop.f32.mrf.mxu0
    %1310 = vdwg.mxu0
    %1311 = vst [vmem:[%s6] sm:$0xff] %v1273
    %1312 = vst [vmem:[%s6 + $0x8] sm:$0xff] %v1278
    %1313 = vst [vmem:[%s6 + $0x10] sm:$0xff] %v1283
    %1314 = vst [vmem:[%s6 + $0x18] sm:$0xff] %v1288
    %1315 = vst [vmem:[%s6 + $0x20] sm:$0xff] %v1293
    %1316 = vst [vmem:[%s6 + $0x28] sm:$0xff] %v1298
    %1317 = vst [vmem:[%s6 + $0x30] sm:$0xff] %v1303
    %1318 = vst [vmem:[%s6 + $0x38] sm:$0xff] %v1308
    // Predicated region
    $region49: #{ocr_forward.1} parent=1 // pred_check
      _
    $region50: #{ocr_forward.1} parent=1 // pred_check_branch
      %1320 = sbr.rel (0) target = $region52
    $region51: #{ocr_forward.1} parent=1 // pred_region
      _
    $region52: #{ocr_forward.1} parent=1 // pred_fallthru
      _
    // Predicated region
    $region53: #{ocr_forward.1} parent=1 // pred_check
      _
    $region54: #{ocr_forward.1} parent=1 // pred_check_branch
      %1322 = sbr.rel (0) target = $region56
    $region55: #{ocr_forward.1} parent=1 // pred_region
      _
    $region56: #{ocr_forward.1} parent=1 // pred_fallthru
      _
    %1323 = vsyncpa [#allocation7], 1
    %1324 = vsyncpa [#allocation9], 1

</llo_original>
